<compile_context>
chip_gen: v5e
topology: v5e:2x2
jax: 0.10.0
libtpu: 0.0.40
codegen_flags: <defaults>
</compile_context>

<pallas_src>
import functools
import math
from typing import NamedTuple, Optional

import jax
import jax.numpy as jnp
from jax.experimental import pallas as pl
from jax.experimental.pallas import tpu as pltpu

NUM_OUT = 13        # color(3) opacity(1) depth(1) normal(3) albedo(3) roughness(1) metallic(1)
NUM_OUT_PAD = 16    # padded to a multiple of 8 sublanes
SH_C0 = 0.28209479177387814
LOG_TERM = math.log(1e-4)   # CUDA early-termination threshold on transmittance


class GaussianRasterizationSettings(NamedTuple):
    image_height: int
    image_width: int
    tanfovx: float
    tanfovy: float
    bg: jnp.ndarray
    scale_modifier: float
    viewmatrix: jnp.ndarray
    projmatrix: jnp.ndarray
    sh_degree: int
    campos: jnp.ndarray
    prefiltered: bool
    debug: bool
    inference: bool
    argmax_depth: bool


def _round_up(x, m):
    return ((x + m - 1) // m) * m


# ----------------------------------------------------------------------------
# Pallas kernel: blocked front-to-back alpha blending on the MXU.
#   grid = (pixel_tiles [parallel], gaussian_chunks [arbitrary, last])
# ----------------------------------------------------------------------------
def _rasterize_kernel(basis_ref, coef_ref, featT_ref, fin_ref, out_ref,
                      acc_ref, logT_ref, logTc_ref, act_ref):
    g = pl.program_id(1)
    gchunk = coef_ref.shape[0]

    @pl.when(g == 0)
    def _init():
        acc_ref[...] = jnp.zeros_like(acc_ref)
        logT_ref[...] = jnp.zeros_like(logT_ref)
        logTc_ref[...] = jnp.zeros_like(logTc_ref)
        act_ref[0] = jnp.float32(0.0)          # max log T over the tile (T = 1)

    # Skip the whole Gaussian chunk once every pixel of this tile is saturated
    # (T < 1e-4 everywhere => no further contributions are possible).
    @pl.when(act_ref[0] >= LOG_TERM)
    def _blend():
        coef = coef_ref[...]                                    # (G, 8)
        basis = basis_ref[...]                                  # (8, Npix)
        # power(px,py) = -0.5*(a dx^2 + c dy^2) - b dx dy, expanded in the
        # pixel basis [px^2, py^2, px*py, px, py, 1, 0, 0]; sign/scale folded
        # into the coefficients in _preprocess.  (f32 operands; for very large
        # images the expanded quadratic loses some precision vs the dx/dy form.)
        power = jnp.dot(coef, basis, preferred_element_type=jnp.float32)  # (G, Npix)
        op = coef[:, 6:7]                                       # opacity column (G, 1)

        alpha_raw = op * jnp.exp(power)
        keep = (power <= 0.0) & (alpha_raw >= (1.0 / 255.0))
        alpha = jnp.where(keep, jnp.minimum(0.99, alpha_raw), 0.0)
        log1m = jnp.log(1.0 - alpha)                            # 0 where alpha == 0

        # Exclusive prefix-sum over depth-sorted Gaussians via a strictly
        # lower-triangular ones matmul (MXU) in log space.
        row = jax.lax.broadcasted_iota(jnp.int32, (gchunk, gchunk), 0)
        col = jax.lax.broadcasted_iota(jnp.int32, (gchunk, gchunk), 1)
        tri = (col < row).astype(jnp.float32)
        cum_excl = jnp.dot(tri, log1m, preferred_element_type=jnp.float32)

        log_t_excl = logT_ref[...] + cum_excl                   # (G, Npix)
        # CUDA termination: Gaussian contributes iff test_T = T*(1-alpha) >= 1e-4.
        contrib = (log_t_excl + log1m) >= LOG_TERM
        w = jnp.where(contrib, alpha * jnp.exp(log_t_excl), 0.0)

        # Packed accumulator: (16, G) @ (G, Npix) -> (16, Npix)
        acc_ref[...] += jnp.dot(featT_ref[...], w, preferred_element_type=jnp.float32)

        logT_new = logT_ref[...] + jnp.sum(log1m, axis=0, keepdims=True)
        logT_ref[...] = logT_new
        logTc_ref[...] += jnp.sum(jnp.where(contrib, log1m, 0.0), axis=0,
                                  keepdims=True)
        act_ref[0] = jnp.max(logT_new)

    @pl.when(g == pl.num_programs(1) - 1)
    def _finalize():
        t_out = jnp.exp(logTc_ref[...])                         # (1, Npix)
        fin = fin_ref[...]                                      # (16, 2)
        # rows 0-2: acc + bg*T ; row 3: 1 - T ; other rows: acc
        out_ref[...] = acc_ref[...] + fin[:, 0:1] * t_out + fin[:, 1:2]


def rasterize_pallas(coefs, featT, fin_tab, height, width):
    hw = height * width
    n_pix = min(512, _round_up(hw, 128))          # wide, lane-dense pixel tile
    hw_pad = _round_up(hw, n_pix)

    num_p = coefs.shape[0]
    gchunk = 128 if num_p <= 128 else 256         # 128 (v5e MXU) / 256 (v6e/v7x)
    p_pad = _round_up(num_p, gchunk)
    if p_pad != num_p:
        coefs = jnp.pad(coefs, ((0, p_pad - num_p), (0, 0)))
        featT = jnp.pad(featT, ((0, 0), (0, p_pad - num_p)))

    # Pixel quadratic basis, hoisted out of the kernel (no in-kernel div/mod).
    idx = jnp.arange(hw_pad, dtype=jnp.int32)
    px = (idx % width).astype(jnp.float32)
    py = (idx // width).astype(jnp.float32)
    ones = jnp.ones_like(px)
    zeros = jnp.zeros_like(px)
    basis = jnp.stack([px * px, py * py, px * py, px, py, ones, zeros, zeros],
                      axis=0)                                    # (8, hw_pad)

    out = pl.pallas_call(
        _rasterize_kernel,
        out_shape=jax.ShapeDtypeStruct((NUM_OUT_PAD, hw_pad), jnp.float32),
        grid=(hw_pad // n_pix, p_pad // gchunk),
        in_specs=[
            pl.BlockSpec((8, n_pix), lambda p, g: (0, p)),            # pixel basis
            pl.BlockSpec((gchunk, 8), lambda p, g: (g, 0)),           # quad coefs + opacity
            pl.BlockSpec((NUM_OUT_PAD, gchunk), lambda p, g: (0, g)), # features^T
            pl.BlockSpec((NUM_OUT_PAD, 2), lambda p, g: (0, 0)),      # bg / opacity finalize
        ],
        out_specs=pl.BlockSpec((NUM_OUT_PAD, n_pix), lambda p, g: (0, p)),
        scratch_shapes=[
            pltpu.VMEM((NUM_OUT_PAD, n_pix), jnp.float32),   # packed accumulator
            pltpu.VMEM((1, n_pix), jnp.float32),             # log T (all valid)
            pltpu.VMEM((1, n_pix), jnp.float32),             # log T (contributing only)
            pltpu.SMEM((1,), jnp.float32),                   # tile-level early-exit flag
        ],
        compiler_params=pltpu.CompilerParams(
            dimension_semantics=("parallel", "arbitrary")),
    )(basis,
      coefs.astype(jnp.float32),
      featT.astype(jnp.float32),
      fin_tab.astype(jnp.float32))
    return out[:NUM_OUT, :hw].reshape(NUM_OUT, height, width)


# ----------------------------------------------------------------------------
# Per-Gaussian preprocessing (projection, covariance, SH) — plain JAX glue.
# ----------------------------------------------------------------------------
def _quat_to_rot(q):
    q = q / jnp.linalg.norm(q, axis=-1, keepdims=True)
    r, x, y, z = q[:, 0], q[:, 1], q[:, 2], q[:, 3]
    R = jnp.stack([
        1 - 2 * (y * y + z * z), 2 * (x * y - r * z), 2 * (x * z + r * y),
        2 * (x * y + r * z), 1 - 2 * (x * x + z * z), 2 * (y * z - r * x),
        2 * (x * z - r * y), 2 * (y * z + r * x), 1 - 2 * (x * x + y * y),
    ], axis=-1).reshape(-1, 3, 3)
    return R


def _preprocess(means3D, opacities, normal, albedo, roughness, metallic,
                shs, colors_precomp, scales, rotations, cov3D_precomp, rs):
    P = means3D.shape[0]
    H, W = rs.image_height, rs.image_width
    ones = jnp.ones((P, 1), jnp.float32)
    ph = jnp.concatenate([means3D, ones], axis=1)

    p_hom = ph @ rs.projmatrix
    p_w = 1.0 / (p_hom[:, 3:4] + 1e-7)
    p_proj = p_hom[:, :3] * p_w
    p_view = ph @ rs.viewmatrix              # convention: p_view = [p,1] @ V
    depth = p_view[:, 2]
    in_frustum = depth > 0.2

    if cov3D_precomp is not None:
        c = cov3D_precomp                    # (P,6): xx xy xz yy yz zz
        Sigma = jnp.stack([c[:, 0], c[:, 1], c[:, 2],
                           c[:, 1], c[:, 3], c[:, 4],
                           c[:, 2], c[:, 4], c[:, 5]], axis=-1).reshape(P, 3, 3)
    else:
        R = _quat_to_rot(rotations)
        s = scales * rs.scale_modifier
        Sigma = jnp.einsum('pij,pj,pkj->pik', R, s * s, R)

    # EWA splatting -> 2D covariance
    focal_x = W / (2.0 * rs.tanfovx)
    focal_y = H / (2.0 * rs.tanfovy)
    tz = jnp.where(jnp.abs(depth) < 1e-6, 1e-6, depth)
    limx, limy = 1.3 * rs.tanfovx, 1.3 * rs.tanfovy
    txtz = jnp.clip(p_view[:, 0] / tz, -limx, limx) * tz
    tytz = jnp.clip(p_view[:, 1] / tz, -limy, limy) * tz
    zeros = jnp.zeros_like(tz)
    J = jnp.stack([
        jnp.stack([focal_x / tz, zeros, -focal_x * txtz / (tz * tz)], axis=-1),
        jnp.stack([zeros, focal_y / tz, -focal_y * tytz / (tz * tz)], axis=-1),
    ], axis=1)                                      # (P,2,3)
    M = jnp.einsum('pij,kj->pik', J, rs.viewmatrix[:3, :3])
    cov2D = jnp.einsum('pij,pjk,plk->pil', M, Sigma, M)
    a = cov2D[:, 0, 0] + 0.3
    b = cov2D[:, 0, 1]
    c2 = cov2D[:, 1, 1] + 0.3
    det = a * c2 - b * b
    det_safe = jnp.where(det == 0.0, 1.0, det)
    conic_a, conic_b, conic_c = c2 / det_safe, -b / det_safe, a / det_safe

    mid = 0.5 * (a + c2)
    lam1 = mid + jnp.sqrt(jnp.maximum(0.1, mid * mid - det))
    radius = jnp.ceil(3.0 * jnp.sqrt(lam1))
    valid = in_frustum & (det > 0.0)
    radii = jnp.where(valid, radius, 0.0).astype(jnp.int32)

    gx = ((p_proj[:, 0] + 1.0) * W - 1.0) * 0.5
    gy = ((p_proj[:, 1] + 1.0) * H - 1.0) * 0.5

    if colors_precomp is not None:
        color = colors_precomp
    else:
        # TODO(synk): only SH degree 0 (view-independent band) is evaluated.
        color = jnp.maximum(SH_C0 * shs[:, 0, :] + 0.5, 0.0)

    op_eff = jnp.where(valid, opacities[:, 0], 0.0)

    # Quadratic coefficients (sign/scale folded in) + opacity in column 6.
    c_px2 = -0.5 * conic_a
    c_py2 = -0.5 * conic_c
    c_pxpy = -conic_b
    c_px = conic_a * gx + conic_b * gy
    c_py = conic_c * gy + conic_b * gx
    c_one = -0.5 * (conic_a * gx * gx + conic_c * gy * gy) - conic_b * gx * gy
    coefs = jnp.stack([c_px2, c_py2, c_pxpy, c_px, c_py, c_one, op_eff,
                       jnp.zeros_like(op_eff)], axis=1)            # (P, 8)
    coefs = jnp.where(valid[:, None], coefs, 0.0)

    # Feature rows already laid out in output-channel order (row 3 = opacity slot).
    zcol = jnp.zeros((P, 1), jnp.float32)
    feat = jnp.concatenate([color, zcol, depth[:, None], normal, albedo,
                            roughness, metallic], axis=1)          # (P, 13)

    # front-to-back order by view-space depth (global sort in lieu of tile binning)
    order = jnp.argsort(jnp.where(valid, depth, jnp.inf))
    coefs = coefs[order]
    feat = feat[order]

    featT = jnp.zeros((NUM_OUT_PAD, P), jnp.float32).at[:feat.shape[1]].set(feat.T)

    # Finalize table: out = acc + fin[:,0]*T + fin[:,1]
    fin = jnp.zeros((NUM_OUT_PAD, 2), jnp.float32)
    fin = fin.at[0:3, 0].set(rs.bg.astype(jnp.float32))
    fin = fin.at[3, 0].set(-1.0)
    fin = fin.at[3, 1].set(1.0)
    return coefs.astype(jnp.float32), featT, fin, radii


# ----------------------------------------------------------------------------
# Module-equivalent wrapper.
# ----------------------------------------------------------------------------
class GaussianRasterizer:
    def __init__(self, raster_settings: GaussianRasterizationSettings):
        self.raster_settings = raster_settings

    def __call__(self, means3D, means2D, opacities, normal, albedo, roughness,
                 metallic, shs=None, colors_precomp=None, scales=None,
                 rotations=None, cov3D_precomp=None, derive_normal=False):
        rs = self.raster_settings
        if (shs is None and colors_precomp is None) or \
           (shs is not None and colors_precomp is not None):
            raise Exception('Please provide excatly one of either SHs or precomputed colors!')
        if ((scales is None or rotations is None) and cov3D_precomp is None) or \
           ((scales is not None or rotations is not None) and cov3D_precomp is not None):
            raise Exception('Please provide exactly one of either scale/rotation pair '
                            'or precomputed 3D covariance!')

        coefs, featT, fin, radii = _preprocess(
            means3D, opacities, normal, albedo, roughness, metallic,
            shs, colors_precomp, scales, rotations, cov3D_precomp, rs)

        maps = rasterize_pallas(coefs, featT, fin, rs.image_height, rs.image_width)

        color = maps[0:3]            # (3, H, W)
        opacity_map = maps[3:4]      # (1, H, W)
        depth = maps[4:5]            # (1, H, W)
        out_normal = maps[5:8]       # (3, H, W)
        albedo_map = maps[8:11]      # (3, H, W)
        roughness_map = maps[11:12]  # (1, H, W)
        metallic_map = maps[12:13]   # (1, H, W)

        # TODO(synk): depth_to_normal (median blur + finite differences) of the
        # derive_normal branch is not implemented; returns zeros as in the
        # derive_normal=False path.
        normal_from_depth = jnp.zeros_like(out_normal)

        return (color, radii, opacity_map, depth, normal_from_depth, out_normal,
                albedo_map, roughness_map, metallic_map)


# ----------------------------------------------------------------------------
# Demo.
# ----------------------------------------------------------------------------
if __name__ == "__main__":
    H = W = 16
    P = 64
    tanfovx = tanfovy = 0.5

    # camera at origin looking down +z ; viewmatrix stored such that
    # p_view = [p, 1] @ V (3DGS "world_view_transform" convention)
    viewmatrix = jnp.eye(4, dtype=jnp.float32)
    znear, zfar = 0.01, 100.0
    proj = jnp.zeros((4, 4), jnp.float32)
    proj = proj.at[0, 0].set(1.0 / tanfovx)
    proj = proj.at[1, 1].set(1.0 / tanfovy)
    proj = proj.at[2, 2].set(zfar / (zfar - znear))
    proj = proj.at[3, 2].set(-(zfar * znear) / (zfar - znear))
    proj = proj.at[2, 3].set(1.0)
    projmatrix = viewmatrix @ proj

    settings = GaussianRasterizationSettings(
        image_height=H, image_width=W, tanfovx=tanfovx, tanfovy=tanfovy,
        bg=jnp.array([0.1, 0.2, 0.3], jnp.float32), scale_modifier=1.0,
        viewmatrix=viewmatrix, projmatrix=projmatrix, sh_degree=0,
        campos=jnp.zeros((3,), jnp.float32), prefiltered=False, debug=False,
        inference=False, argmax_depth=False)

    key = jax.random.PRNGKey(0)
    ks = jax.random.split(key, 10)
    means3D = jnp.concatenate(
        [jax.random.uniform(ks[0], (P, 2), minval=-1.0, maxval=1.0),
         jax.random.uniform(ks[1], (P, 1), minval=2.0, maxval=4.0)], axis=1)
    means2D = jnp.zeros((P, 3), jnp.float32)                 # gradient buffer (unused)
    opacities = jax.nn.sigmoid(jax.random.normal(ks[2], (P, 1)))
    normal = jax.random.normal(ks[3], (P, 3))
    normal = normal / jnp.linalg.norm(normal, axis=1, keepdims=True)
    albedo = jax.random.uniform(ks[4], (P, 3))
    roughness = jax.random.uniform(ks[5], (P, 1))
    metallic = jax.random.uniform(ks[6], (P, 1))
    shs = 0.5 * jax.random.normal(ks[7], (P, 1, 3))          # sh_degree=0
    scales = jax.random.uniform(ks[8], (P, 3), minval=0.05, maxval=0.3)
    rotations = jax.random.normal(ks[9], (P, 4))

    rasterizer = GaussianRasterizer(settings)
    outs = rasterizer(means3D, means2D, opacities, normal, albedo, roughness,
                      metallic, shs=shs, scales=scales, rotations=rotations)
    outs = jax.block_until_ready(outs)

    (color, radii, opacity_map, depth, normal_from_depth, out_normal,
     albedo_map, roughness_map, metallic_map) = outs
    assert color.shape == (3, H, W) and radii.shape == (P,)
    assert opacity_map.shape == (1, H, W) and depth.shape == (1, H, W)
    assert out_normal.shape == (3, H, W) and albedo_map.shape == (3, H, W)
    assert roughness_map.shape == (1, H, W) and metallic_map.shape == (1, H, W)
    for arr in (color, opacity_map, depth, normal_from_depth, out_normal,
                albedo_map, roughness_map, metallic_map):
        assert bool(jnp.all(jnp.isfinite(arr)))
    print("KERNEL_OK")
</pallas_src>

<mosaic_0001>
module attributes {stable_mosaic.version = 11 : i64} {
  func.func @_rasterize_kernel(%arg0: i32, %arg1: i32, %arg2: memref<8x256xf32, #tpu.memory_space<vmem>>, %arg3: memref<128x8xf32, #tpu.memory_space<vmem>>, %arg4: memref<16x128xf32, #tpu.memory_space<vmem>>, %arg5: memref<16x2xf32, #tpu.memory_space<vmem>>, %arg6: memref<16x256xf32, #tpu.memory_space<vmem>>, %arg7: memref<16x256xf32, #tpu.memory_space<vmem>>, %arg8: memref<1x256xf32, #tpu.memory_space<vmem>>, %arg9: memref<1x256xf32, #tpu.memory_space<vmem>>, %arg10: memref<1xf32, #tpu.memory_space<smem>>) attributes {dimension_semantics = [#tpu.dimension_semantics<parallel>, #tpu.dimension_semantics<arbitrary>], iteration_bounds = array<i64: 1, 1>, scalar_prefetch = 0 : i64, scratch_operands = 4 : i64, tpu.core_type = #tpu.core_type<tc>, window_params = [{transform_indices = @transform_0, window_bounds = array<i64: 8, 256>}, {transform_indices = @transform_1, window_bounds = array<i64: 128, 8>}, {transform_indices = @transform_2, window_bounds = array<i64: 16, 128>}, {pipeline_mode = #tpu.pipeline_mode<synchronous>, transform_indices = @transform_3, window_bounds = array<i64: 16, 2>}, {transform_indices = @transform_4, window_bounds = array<i64: 16, 256>}]} {
    %c0_i32 = arith.constant 0 : i32
    %0 = arith.cmpi eq, %arg1, %c0_i32 : i32
    %1 = arith.extui %0 : i1 to i32
    %c0_i32_0 = arith.constant 0 : i32
    %2 = arith.cmpi ne, %1, %c0_i32_0 : i32
    scf.if %2 {
      %cst_4 = arith.constant 0.000000e+00 : f32
      %10 = vector.broadcast %cst_4 : f32 to vector<16x256xf32>
      %c0_5 = arith.constant 0 : index
      %c0_6 = arith.constant 0 : index
      %11 = vector.load %arg7[%c0_5, %c0_6] : memref<16x256xf32, #tpu.memory_space<vmem>>, vector<16x256xf32>
      tpu.vector_store %arg7[%c0_5, %c0_6], %10 {strides = array<i32>} : memref<16x256xf32, #tpu.memory_space<vmem>>, vector<16x256xf32>,
      %cst_7 = arith.constant 0.000000e+00 : f32
      %12 = vector.broadcast %cst_7 : f32 to vector<1x256xf32>
      %c0_8 = arith.constant 0 : index
      %c0_9 = arith.constant 0 : index
      %13 = vector.load %arg8[%c0_8, %c0_9] : memref<1x256xf32, #tpu.memory_space<vmem>>, vector<1x256xf32>
      tpu.vector_store %arg8[%c0_8, %c0_9], %12 {strides = array<i32>} : memref<1x256xf32, #tpu.memory_space<vmem>>, vector<1x256xf32>,
      %cst_10 = arith.constant 0.000000e+00 : f32
      %14 = vector.broadcast %cst_10 : f32 to vector<1x256xf32>
      %c0_11 = arith.constant 0 : index
      %c0_12 = arith.constant 0 : index
      %15 = vector.load %arg9[%c0_11, %c0_12] : memref<1x256xf32, #tpu.memory_space<vmem>>, vector<1x256xf32>
      tpu.vector_store %arg9[%c0_11, %c0_12], %14 {strides = array<i32>} : memref<1x256xf32, #tpu.memory_space<vmem>>, vector<1x256xf32>,
      %cst_13 = arith.constant 0.000000e+00 : f32
      %c0_14 = arith.constant 0 : index
      %16 = memref.load %arg10[%c0_14] : memref<1xf32, #tpu.memory_space<smem>>
      memref.store %cst_13, %arg10[%c0_14] : memref<1xf32, #tpu.memory_space<smem>>
    } else {
    }
    %c0 = arith.constant 0 : index
    %3 = memref.load %arg10[%c0] : memref<1xf32, #tpu.memory_space<smem>>
    %cst = arith.constant -9.21034049 : f32
    %4 = arith.cmpf oge, %3, %cst : f32
    %5 = arith.extui %4 : i1 to i32
    %c0_i32_1 = arith.constant 0 : i32
    %6 = arith.cmpi ne, %5, %c0_i32_1 : i32
    scf.if %6 {
      %c0_4 = arith.constant 0 : index
      %c0_5 = arith.constant 0 : index
      %10 = vector.load %arg3[%c0_4, %c0_5] : memref<128x8xf32, #tpu.memory_space<vmem>>, vector<128x8xf32>
      %c0_6 = arith.constant 0 : index
      %c0_7 = arith.constant 0 : index
      %11 = vector.load %arg2[%c0_6, %c0_7] : memref<8x256xf32, #tpu.memory_space<vmem>>, vector<8x256xf32>
      %cst_8 = arith.constant dense<0.000000e+00> : vector<128x256xf32>
      %12 = tpu.matmul %10, %11, %cst_8 {dimension_numbers = #tpu.dot_dimension_numbers<[1], [0], [0], [1], [0, 0, 1, 1], [], []>} : vector<128x8xf32>, vector<8x256xf32>, vector<128x256xf32> -> vector<128x256xf32>
      %13 = vector.extract_strided_slice %10 {offsets = [0, 6], sizes = [128, 1], strides = [1, 1]} : vector<128x8xf32> to vector<128x1xf32>
      %14 = math.exp %12 : vector<128x256xf32>
      %15 = vector.broadcast %13 : vector<128x1xf32> to vector<128x256xf32>
      %16 = arith.mulf %15, %14 : vector<128x256xf32>
      %cst_9 = arith.constant 0.000000e+00 : f32
      %17 = vector.broadcast %cst_9 : f32 to vector<128x256xf32>
      %18 = arith.cmpf ole, %12, %17 : vector<128x256xf32>
      %cst_10 = arith.constant 0.00392156886 : f32
      %19 = vector.broadcast %cst_10 : f32 to vector<128x256xf32>
      %20 = arith.cmpf oge, %16, %19 : vector<128x256xf32>
      %21 = arith.andi %18, %20 : vector<128x256xi1>
      %cst_11 = arith.constant 9.900000e-01 : f32
      %22 = vector.broadcast %cst_11 : f32 to vector<128x256xf32>
      %23 = arith.minimumf %22, %16 : vector<128x256xf32>
      %cst_12 = arith.constant 0.000000e+00 : f32
      %24 = vector.broadcast %cst_12 : f32 to vector<128x256xf32>
      %25 = arith.select %21, %23, %24 : vector<128x256xi1>, vector<128x256xf32>
      %cst_13 = arith.constant 1.000000e+00 : f32
      %26 = vector.broadcast %cst_13 : f32 to vector<128x256xf32>
      %27 = arith.subf %26, %25 : vector<128x256xf32>
      %28 = math.log %27 : vector<128x256xf32>
      %29 = tpu.iota {dimensions = array<i32: 0>} : vector<128x128xi32>
      %30 = tpu.iota {dimensions = array<i32: 1>} : vector<128x128xi32>
      %31 = arith.cmpi slt, %30, %29 : vector<128x128xi32>
      %32 = arith.extui %31 : vector<128x128xi1> to vector<128x128xi32>
      %33 = arith.sitofp %32 : vector<128x128xi32> to vector<128x128xf32>
      %cst_14 = arith.constant dense<0.000000e+00> : vector<128x256xf32>
      %34 = tpu.matmul %33, %28, %cst_14 {dimension_numbers = #tpu.dot_dimension_numbers<[1], [0], [0], [1], [0, 0, 1, 1], [], []>} : vector<128x128xf32>, vector<128x256xf32>, vector<128x256xf32> -> vector<128x256xf32>
      %c0_15 = arith.constant 0 : index
      %c0_16 = arith.constant 0 : index
      %35 = vector.load %arg8[%c0_15, %c0_16] : memref<1x256xf32, #tpu.memory_space<vmem>>, vector<1x256xf32>
      %36 = vector.broadcast %35 : vector<1x256xf32> to vector<128x256xf32>
      %37 = arith.addf %36, %34 : vector<128x256xf32>
      %38 = arith.addf %37, %28 : vector<128x256xf32>
      %cst_17 = arith.constant -9.21034049 : f32
      %39 = vector.broadcast %cst_17 : f32 to vector<128x256xf32>
      %40 = arith.cmpf oge, %38, %39 : vector<128x256xf32>
      %41 = math.exp %37 : vector<128x256xf32>
      %42 = arith.mulf %25, %41 : vector<128x256xf32>
      %cst_18 = arith.constant 0.000000e+00 : f32
      %43 = vector.broadcast %cst_18 : f32 to vector<128x256xf32>
      %44 = arith.select %40, %42, %43 : vector<128x256xi1>, vector<128x256xf32>
      %c0_19 = arith.constant 0 : index
      %c0_20 = arith.constant 0 : index
      %45 = vector.load %arg7[%c0_19, %c0_20] : memref<16x256xf32, #tpu.memory_space<vmem>>, vector<16x256xf32>
      %c0_21 = arith.constant 0 : index
      %c0_22 = arith.constant 0 : index
      %46 = vector.load %arg4[%c0_21, %c0_22] : memref<16x128xf32, #tpu.memory_space<vmem>>, vector<16x128xf32>
      %cst_23 = arith.constant dense<0.000000e+00> : vector<16x256xf32>
      %47 = tpu.matmul %46, %44, %cst_23 {dimension_numbers = #tpu.dot_dimension_numbers<[1], [0], [0], [1], [0, 0, 1, 1], [], []>} : vector<16x128xf32>, vector<128x256xf32>, vector<16x256xf32> -> vector<16x256xf32>
      %48 = arith.addf %45, %47 : vector<16x256xf32>
      %c0_24 = arith.constant 0 : index
      %c0_25 = arith.constant 0 : index
      %49 = vector.load %arg7[%c0_24, %c0_25] : memref<16x256xf32, #tpu.memory_space<vmem>>, vector<16x256xf32>
      tpu.vector_store %arg7[%c0_24, %c0_25], %48 {strides = array<i32>} : memref<16x256xf32, #tpu.memory_space<vmem>>, vector<16x256xf32>,
      %c0_26 = arith.constant 0 : index
      %c0_27 = arith.constant 0 : index
      %50 = vector.load %arg8[%c0_26, %c0_27] : memref<1x256xf32, #tpu.memory_space<vmem>>, vector<1x256xf32>
      %cst_28 = arith.constant dense<0.000000e+00> : vector<256xf32>
      %51 = vector.multi_reduction <add>, %28, %cst_28 [0] : vector<128x256xf32> to vector<256xf32>
      %52 = vector.shape_cast %51 : vector<256xf32> to vector<1x256xf32>
      %53 = arith.addf %50, %52 : vector<1x256xf32>
      %c0_29 = arith.constant 0 : index
      %c0_30 = arith.constant 0 : index
      %54 = vector.load %arg8[%c0_29, %c0_30] : memref<1x256xf32, #tpu.memory_space<vmem>>, vector<1x256xf32>
      tpu.vector_store %arg8[%c0_29, %c0_30], %53 {strides = array<i32>} : memref<1x256xf32, #tpu.memory_space<vmem>>, vector<1x256xf32>,
      %c0_31 = arith.constant 0 : index
      %c0_32 = arith.constant 0 : index
      %55 = vector.load %arg9[%c0_31, %c0_32] : memref<1x256xf32, #tpu.memory_space<vmem>>, vector<1x256xf32>
      %cst_33 = arith.constant 0.000000e+00 : f32
      %56 = vector.broadcast %cst_33 : f32 to vector<128x256xf32>
      %57 = arith.select %40, %28, %56 : vector<128x256xi1>, vector<128x256xf32>
      %cst_34 = arith.constant dense<0.000000e+00> : vector<256xf32>
      %58 = vector.multi_reduction <add>, %57, %cst_34 [0] : vector<128x256xf32> to vector<256xf32>
      %59 = vector.shape_cast %58 : vector<256xf32> to vector<1x256xf32>
      %60 = arith.addf %55, %59 : vector<1x256xf32>
      %c0_35 = arith.constant 0 : index
      %c0_36 = arith.constant 0 : index
      %61 = vector.load %arg9[%c0_35, %c0_36] : memref<1x256xf32, #tpu.memory_space<vmem>>, vector<1x256xf32>
      tpu.vector_store %arg9[%c0_35, %c0_36], %60 {strides = array<i32>} : memref<1x256xf32, #tpu.memory_space<vmem>>, vector<1x256xf32>,
      %62 = vector.shape_cast %53 : vector<1x256xf32> to vector<1x1x256xf32>
      %cst_37 = arith.constant dense<0xFF800000> : vector<1xf32>
      %63 = vector.multi_reduction <maximumf>, %62, %cst_37 [1, 2] : vector<1x1x256xf32> to vector<1xf32>
      %64 = vector.shape_cast %63 : vector<1xf32> to vector<1x1x1xf32>
      %65 = vector.extract %64[0, 0, 0] : f32 from vector<1x1x1xf32>
      %c0_38 = arith.constant 0 : index
      %66 = memref.load %arg10[%c0_38] : memref<1xf32, #tpu.memory_space<smem>>
      memref.store %65, %arg10[%c0_38] : memref<1xf32, #tpu.memory_space<smem>>
    } else {
    }
    %c0_i32_2 = arith.constant 0 : i32
    %7 = arith.cmpi eq, %arg1, %c0_i32_2 : i32
    %8 = arith.extui %7 : i1 to i32
    %c0_i32_3 = arith.constant 0 : i32
    %9 = arith.cmpi ne, %8, %c0_i32_3 : i32
    scf.if %9 {
      %c0_4 = arith.constant 0 : index
      %c0_5 = arith.constant 0 : index
      %10 = vector.load %arg9[%c0_4, %c0_5] : memref<1x256xf32, #tpu.memory_space<vmem>>, vector<1x256xf32>
      %11 = math.exp %10 : vector<1x256xf32>
      %c0_6 = arith.constant 0 : index
      %c0_7 = arith.constant 0 : index
      %12 = vector.load %arg5[%c0_6, %c0_7] : memref<16x2xf32, #tpu.memory_space<vmem>>, vector<16x2xf32>
      %c0_8 = arith.constant 0 : index
      %c0_9 = arith.constant 0 : index
      %13 = vector.load %arg7[%c0_8, %c0_9] : memref<16x256xf32, #tpu.memory_space<vmem>>, vector<16x256xf32>
      %14 = vector.extract_strided_slice %12 {offsets = [0, 0], sizes = [16, 1], strides = [1, 1]} : vector<16x2xf32> to vector<16x1xf32>
      %15 = vector.broadcast %14 : vector<16x1xf32> to vector<16x256xf32>
      %16 = vector.broadcast %11 : vector<1x256xf32> to vector<16x256xf32>
      %17 = arith.mulf %15, %16 : vector<16x256xf32>
      %18 = arith.addf %13, %17 : vector<16x256xf32>
      %19 = vector.extract_strided_slice %12 {offsets = [0, 1], sizes = [16, 1], strides = [1, 1]} : vector<16x2xf32> to vector<16x1xf32>
      %20 = vector.broadcast %19 : vector<16x1xf32> to vector<16x256xf32>
      %21 = arith.addf %18, %20 : vector<16x256xf32>
      %c0_10 = arith.constant 0 : index
      %c0_11 = arith.constant 0 : index
      %22 = vector.load %arg6[%c0_10, %c0_11] : memref<16x256xf32, #tpu.memory_space<vmem>>, vector<16x256xf32>
      tpu.vector_store %arg6[%c0_10, %c0_11], %21 {strides = array<i32>} : memref<16x256xf32, #tpu.memory_space<vmem>>, vector<16x256xf32>,
    } else {
    }
    return
  }
  func.func @transform_0(%arg0: i32, %arg1: i32) -> (i32, i32) {
    %c0_i32 = arith.constant 0 : i32
    %c0_i32_0 = arith.constant 0 : i32
    return %c0_i32, %arg0 : i32, i32
  }
  func.func @transform_1(%arg0: i32, %arg1: i32) -> (i32, i32) {
    %c0_i32 = arith.constant 0 : i32
    %c0_i32_0 = arith.constant 0 : i32
    return %arg1, %c0_i32 : i32, i32
  }
  func.func @transform_2(%arg0: i32, %arg1: i32) -> (i32, i32) {
    %c0_i32 = arith.constant 0 : i32
    %c0_i32_0 = arith.constant 0 : i32
    return %c0_i32, %arg1 : i32, i32
  }
  func.func @transform_3(%arg0: i32, %arg1: i32) -> (i32, i32) {
    %c0_i32 = arith.constant 0 : i32
    %c0_i32_0 = arith.constant 0 : i32
    %c0_i32_1 = arith.constant 0 : i32
    return %c0_i32, %c0_i32_0 : i32, i32
  }
  func.func @transform_4(%arg0: i32, %arg1: i32) -> (i32, i32) {
    %c0_i32 = arith.constant 0 : i32
    %c0_i32_0 = arith.constant 0 : i32
    return %c0_i32, %arg0 : i32, i32
  }
}

</mosaic_0001>

<llo_original>
// kernel: tpu_custom_call.1
$region0: #{tpu_custom_call.1}
  #allocation0 [shape = 'u32[]', space=smem, size = 0x4, offset = 0x4, fixed_abs, tag = 'smem constant byte address 0x4 - core index']
  #allocation1 [shape = 'u32[72,128]{1,0:T(1,128)}', space=vmem, size = 0x9000, scoped, tag = 'internal scratch']
  #allocation2 [shape = 'f32[16,256]{1,0:T(8,128)}', space=vmem, size = 0x4000, scoped, tag = 'scratch operand']
  #allocation3 [shape = 'f32[1,256]{1,0:T(1,128)}', space=vmem, size = 0x400, scoped, tag = 'scratch operand']
  #allocation4 [shape = 'f32[1,256]{1,0:T(1,128)}', space=vmem, size = 0x400, scoped, tag = 'scratch operand']
  #allocation5 [shape = 'f32[1]{0:T(128)}', space=smem, size = 0x200, scoped, tag = 'scratch operand']
  %s0 = inlined_call_operand.vmem [shape: f32[8,256], index: 0, kind: input, shape index: {}]
  %s1 = inlined_call_operand.vmem [shape: f32[128,8], index: 1, kind: input, shape index: {}]
  %s2 = inlined_call_operand.vmem [shape: f32[16,128], index: 2, kind: input, shape index: {}]
  %s3 = inlined_call_operand.vmem [shape: f32[16,2], index: 3, kind: input, shape index: {}]
  %s4 = inlined_call_operand.hbm [shape: f32[16,256], index: 4, kind: output, shape index: {}]
  %s5 = sld [smem:[#allocation0]]
  $region38: #{tpu_custom_call.1} parent=0
    _
  %s7 = ssub.s32 1, %s5
  %s8 = scalar_select 0, %s7, %s5
  $region1: #{tpu_custom_call.1} parent=0
    #allocation6 [shape = 'u8[16384]{0}', space=vmem, size = 0x4000, scoped, tag = 'output window, operand 0, single buffered']
    #allocation7 [shape = 's32[1]{0}', space=sflag, size = 0x4, scoped, tag = 'scoped memory for tpu_custom_call.1']
    %9 = vsyncpa [#allocation7], 0
    // Predicated region
    $region2: #{tpu_custom_call.1} parent=1 // pred_check
      _
    $region3: #{tpu_custom_call.1} parent=1 // pred_check_branch
      %11 = sbr.rel (0) target = $region5
    $region4: #{tpu_custom_call.1} parent=1 // pred_region
      _
    $region5: #{tpu_custom_call.1} parent=1 // pred_fallthru
      _
    // Predicated region
    $region6: #{tpu_custom_call.1} parent=1 // pred_check
      _
    $region7: #{tpu_custom_call.1} parent=1 // pred_check_branch
      %13 = sbr.rel (0) target = $region9
    $region8: #{tpu_custom_call.1} parent=1 // pred_region
      _
    $region9: #{tpu_custom_call.1} parent=1 // pred_fallthru
      _
    // Predicated region
    $region10: #{tpu_custom_call.1} parent=1 // pred_check
      _
    $region11: #{tpu_custom_call.1} parent=1 // pred_check_branch
      %15 = sbr.rel (0) target = $region13
    $region12: #{tpu_custom_call.1} parent=1 // pred_region
      _
    $region13: #{tpu_custom_call.1} parent=1 // pred_fallthru
      _
    // Predicated region
    $region14: #{tpu_custom_call.1} parent=1 // pred_check
      _
    $region15: #{tpu_custom_call.1} parent=1 // pred_check_branch
      %17 = sbr.rel (0) target = $region17
    $region16: #{tpu_custom_call.1} parent=1 // pred_region
      _
    $region17: #{tpu_custom_call.1} parent=1 // pred_fallthru
      _
    %p18 = scmp.eq.s32.totalorder 0, 0
    // Predicated region
    $region18: #{tpu_custom_call.1} parent=1 // pred_check
      %p19 = pneg %p18
    $region19: #{tpu_custom_call.1} parent=1 // pred_check_branch
      %21 = sbr.rel (%p19) target = $region21
    $region20: #{tpu_custom_call.1} parent=1 // pred_region
      %22 = vst [vmem:[#allocation2] sm:$0xff] 0.0
      %23 = vst [vmem:[#allocation2 + $0x8] sm:$0xff] 0.0
      %24 = vst [vmem:[#allocation2 + $0x10] sm:$0xff] 0.0
      %25 = vst [vmem:[#allocation2 + $0x18] sm:$0xff] 0.0
      %v26 = vlaneseq
      %vm27 = vcmp.ge.s32.totalorder %v26, 0
      %vm28 = vcmp.lt.s32.totalorder %v26, 256
      %vm29 = vmand %vm27, %vm28
      %30 = vst.msk [vmem:[#allocation3] sm:$0x3] %vm29, 0.0
      %31 = vst.msk [vmem:[#allocation4] sm:$0x3] %vm29, 0.0
      %s32 = scalar_lea.smem [#allocation5], 0
      %33 = sst [smem:[%s32]] 0.0
    $region21: #{tpu_custom_call.1} parent=1 // pred_fallthru
      _
    %s34 = sld [smem:[#allocation5]]
    %p35 = scmp.ge.f32.partialorder %s34, -9.2103405
    // Predicated region
    $region22: #{tpu_custom_call.1} parent=1 // pred_check
      %p36 = pneg %p35
    $region23: #{tpu_custom_call.1} parent=1 // pred_check_branch
      %38 = sbr.rel (%p36) target = $region25
    $region24: #{tpu_custom_call.1} parent=1 // pred_region
      %v39 = vld [vmem:[%s1] sm:$0xff]
      %v40 = vld [vmem:[%s1 + $0x8] sm:$0xff]
      %v41 = vld [vmem:[%s1 + $0x10] sm:$0xff]
      %v42 = vld [vmem:[%s1 + $0x18] sm:$0xff]
      %v43 = vld [vmem:[%s1 + $0x20] sm:$0xff]
      %v44 = vld [vmem:[%s1 + $0x28] sm:$0xff]
      %v45 = vld [vmem:[%s1 + $0x30] sm:$0xff]
      %v46 = vld [vmem:[%s1 + $0x38] sm:$0xff]
      %v47 = vld [vmem:[%s1 + $0x40] sm:$0xff]
      %v48 = vld [vmem:[%s1 + $0x48] sm:$0xff]
      %v49 = vld [vmem:[%s1 + $0x50] sm:$0xff]
      %v50 = vld [vmem:[%s1 + $0x58] sm:$0xff]
      %v51 = vld [vmem:[%s1 + $0x60] sm:$0xff]
      %v52 = vld [vmem:[%s1 + $0x68] sm:$0xff]
      %v53 = vld [vmem:[%s1 + $0x70] sm:$0xff]
      %v54 = vld [vmem:[%s1 + $0x78] sm:$0xff]
      %v55 = vld [vmem:[%s0] sm:$0xff]
      %v56 = vld [vmem:[%s0 + $0x8] sm:$0xff]
      %vm57 = vcmask 64512
      %v59 = vsel %vm57, %v39, 0
      %v62 = vsel %vm57, %v40, 0
      %v65 = vsel %vm57, %v41, 0
      %v68 = vsel %vm57, %v42, 0
      %v71 = vsel %vm57, %v43, 0
      %v74 = vsel %vm57, %v44, 0
      %v77 = vsel %vm57, %v45, 0
      %v80 = vsel %vm57, %v46, 0
      %v83 = vsel %vm57, %v47, 0
      %v86 = vsel %vm57, %v48, 0
      %v89 = vsel %vm57, %v49, 0
      %v92 = vsel %vm57, %v50, 0
      %v95 = vsel %vm57, %v51, 0
      %v98 = vsel %vm57, %v52, 0
      %v101 = vsel %vm57, %v53, 0
      %v104 = vsel %vm57, %v54, 0
      %106 = vmatpush.msra.mxu0 0.0
      %107 = vmatpush.msra.mxu0 0.0
      %108 = vmatpush.msra.mxu0 0.0
      %109 = vmatpush.msra.mxu0 0.0
      %110 = vmatpush.msra.mxu0 0.0
      %111 = vmatpush.msra.mxu0 0.0
      %112 = vmatpush.msra.mxu0 0.0
      %113 = vmatpush.msra.mxu0 0.0
      %114 = vmatpush.msra.mxu0 0.0
      %115 = vmatpush.msra.mxu0 0.0
      %116 = vmatpush.msra.mxu0 0.0
      %117 = vmatpush.msra.mxu0 0.0
      %118 = vmatpush.msra.mxu0 0.0
      %119 = vmatpush.msra.mxu0 0.0
      %120 = vmatpush.msra.mxu0 0.0
      %121 = vmatpush.msra.mxu0 %v55
      %122 = vmatmul.f32.gmra.mxu0 %v59
      %v123 = vpop.f32.mrf.mxu0
      %v124 = vadd.f32 0.0, %v123
      %125 = vmatmul.f32.gmra.mxu0 %v62
      %v126 = vpop.f32.mrf.mxu0
      %v127 = vadd.f32 0.0, %v126
      %128 = vmatmul.f32.gmra.mxu0 %v65
      %v129 = vpop.f32.mrf.mxu0
      %v130 = vadd.f32 0.0, %v129
      %131 = vmatmul.f32.gmra.mxu0 %v68
      %v132 = vpop.f32.mrf.mxu0
      %v133 = vadd.f32 0.0, %v132
      %134 = vmatmul.f32.gmra.mxu0 %v71
      %v135 = vpop.f32.mrf.mxu0
      %v136 = vadd.f32 0.0, %v135
      %137 = vmatmul.f32.gmra.mxu0 %v74
      %v138 = vpop.f32.mrf.mxu0
      %v139 = vadd.f32 0.0, %v138
      %140 = vmatmul.f32.gmra.mxu0 %v77
      %v141 = vpop.f32.mrf.mxu0
      %v142 = vadd.f32 0.0, %v141
      %143 = vmatmul.f32.gmra.mxu0 %v80
      %v144 = vpop.f32.mrf.mxu0
      %v145 = vadd.f32 0.0, %v144
      %146 = vmatmul.f32.gmra.mxu0 %v83
      %v147 = vpop.f32.mrf.mxu0
      %v148 = vadd.f32 0.0, %v147
      %149 = vmatmul.f32.gmra.mxu0 %v86
      %v150 = vpop.f32.mrf.mxu0
      %v151 = vadd.f32 0.0, %v150
      %152 = vmatmul.f32.gmra.mxu0 %v89
      %v153 = vpop.f32.mrf.mxu0
      %v154 = vadd.f32 0.0, %v153
      %155 = vmatmul.f32.gmra.mxu0 %v92
      %v156 = vpop.f32.mrf.mxu0
      %v157 = vadd.f32 0.0, %v156
      %158 = vmatmul.f32.gmra.mxu0 %v95
      %v159 = vpop.f32.mrf.mxu0
      %v160 = vadd.f32 0.0, %v159
      %161 = vmatmul.f32.gmra.mxu0 %v98
      %v162 = vpop.f32.mrf.mxu0
      %v163 = vadd.f32 0.0, %v162
      %164 = vmatmul.f32.gmra.mxu0 %v101
      %v165 = vpop.f32.mrf.mxu0
      %v166 = vadd.f32 0.0, %v165
      %167 = vmatmul.f32.gmra.mxu0 %v104
      %v168 = vpop.f32.mrf.mxu0
      %v169 = vadd.f32 0.0, %v168
      %170 = vdwg.mxu0
      %171 = vmatpush.msra.mxu0 0.0
      %172 = vmatpush.msra.mxu0 0.0
      %173 = vmatpush.msra.mxu0 0.0
      %174 = vmatpush.msra.mxu0 0.0
      %175 = vmatpush.msra.mxu0 0.0
      %176 = vmatpush.msra.mxu0 0.0
      %177 = vmatpush.msra.mxu0 0.0
      %178 = vmatpush.msra.mxu0 0.0
      %179 = vmatpush.msra.mxu0 0.0
      %180 = vmatpush.msra.mxu0 0.0
      %181 = vmatpush.msra.mxu0 0.0
      %182 = vmatpush.msra.mxu0 0.0
      %183 = vmatpush.msra.mxu0 0.0
      %184 = vmatpush.msra.mxu0 0.0
      %185 = vmatpush.msra.mxu0 0.0
      %186 = vmatpush.msra.mxu0 %v56
      %187 = vmatmul.f32.gmra.mxu0 %v59
      %v188 = vpop.f32.mrf.mxu0
      %v189 = vadd.f32 0.0, %v188
      %190 = vmatmul.f32.gmra.mxu0 %v62
      %v191 = vpop.f32.mrf.mxu0
      %v192 = vadd.f32 0.0, %v191
      %193 = vmatmul.f32.gmra.mxu0 %v65
      %v194 = vpop.f32.mrf.mxu0
      %v195 = vadd.f32 0.0, %v194
      %196 = vmatmul.f32.gmra.mxu0 %v68
      %v197 = vpop.f32.mrf.mxu0
      %v198 = vadd.f32 0.0, %v197
      %199 = vmatmul.f32.gmra.mxu0 %v71
      %v200 = vpop.f32.mrf.mxu0
      %v201 = vadd.f32 0.0, %v200
      %202 = vmatmul.f32.gmra.mxu0 %v74
      %v203 = vpop.f32.mrf.mxu0
      %v204 = vadd.f32 0.0, %v203
      %205 = vmatmul.f32.gmra.mxu0 %v77
      %v206 = vpop.f32.mrf.mxu0
      %v207 = vadd.f32 0.0, %v206
      %208 = vmatmul.f32.gmra.mxu0 %v80
      %v209 = vpop.f32.mrf.mxu0
      %v210 = vadd.f32 0.0, %v209
      %211 = vmatmul.f32.gmra.mxu0 %v83
      %v212 = vpop.f32.mrf.mxu0
      %v213 = vadd.f32 0.0, %v212
      %214 = vmatmul.f32.gmra.mxu0 %v86
      %v215 = vpop.f32.mrf.mxu0
      %v216 = vadd.f32 0.0, %v215
      %217 = vmatmul.f32.gmra.mxu0 %v89
      %v218 = vpop.f32.mrf.mxu0
      %v219 = vadd.f32 0.0, %v218
      %220 = vmatmul.f32.gmra.mxu0 %v92
      %v221 = vpop.f32.mrf.mxu0
      %v222 = vadd.f32 0.0, %v221
      %223 = vmatmul.f32.gmra.mxu0 %v95
      %v224 = vpop.f32.mrf.mxu0
      %v225 = vadd.f32 0.0, %v224
      %226 = vmatmul.f32.gmra.mxu0 %v98
      %v227 = vpop.f32.mrf.mxu0
      %v228 = vadd.f32 0.0, %v227
      %229 = vmatmul.f32.gmra.mxu0 %v101
      %v230 = vpop.f32.mrf.mxu0
      %v231 = vadd.f32 0.0, %v230
      %232 = vmatmul.f32.gmra.mxu0 %v104
      %v233 = vpop.f32.mrf.mxu0
      %v234 = vadd.f32 0.0, %v233
      %235 = vdwg.mxu0
      %v236 = vmul.f32 %v124, 1.442695
      %v237 = vpow.pop %v236
      %v238 = vmul.f32 %v189, 1.442695
      %v239 = vpow.pop %v238
      %v240 = vmul.f32 %v127, 1.442695
      %v241 = vpow.pop %v240
      %v242 = vmul.f32 %v192, 1.442695
      %v243 = vpow.pop %v242
      %v244 = vmul.f32 %v130, 1.442695
      %v245 = vpow.pop %v244
      %v246 = vmul.f32 %v195, 1.442695
      %v247 = vpow.pop %v246
      %v248 = vmul.f32 %v133, 1.442695
      %v249 = vpow.pop %v248
      %v250 = vmul.f32 %v198, 1.442695
      %v251 = vpow.pop %v250
      %v252 = vmul.f32 %v136, 1.442695
      %v253 = vpow.pop %v252
      %v254 = vmul.f32 %v201, 1.442695
      %v255 = vpow.pop %v254
      %v256 = vmul.f32 %v139, 1.442695
      %v257 = vpow.pop %v256
      %v258 = vmul.f32 %v204, 1.442695
      %v259 = vpow.pop %v258
      %v260 = vmul.f32 %v142, 1.442695
      %v261 = vpow.pop %v260
      %v262 = vmul.f32 %v207, 1.442695
      %v263 = vpow.pop %v262
      %v264 = vmul.f32 %v145, 1.442695
      %v265 = vpow.pop %v264
      %v266 = vmul.f32 %v210, 1.442695
      %v267 = vpow.pop %v266
      %v268 = vmul.f32 %v148, 1.442695
      %v269 = vpow.pop %v268
      %v270 = vmul.f32 %v213, 1.442695
      %v271 = vpow.pop %v270
      %v272 = vmul.f32 %v151, 1.442695
      %v273 = vpow.pop %v272
      %v274 = vmul.f32 %v216, 1.442695
      %v275 = vpow.pop %v274
      %v276 = vmul.f32 %v154, 1.442695
      %v277 = vpow.pop %v276
      %v278 = vmul.f32 %v219, 1.442695
      %v279 = vpow.pop %v278
      %v280 = vmul.f32 %v157, 1.442695
      %v281 = vpow.pop %v280
      %v282 = vmul.f32 %v222, 1.442695
      %v283 = vpow.pop %v282
      %v284 = vmul.f32 %v160, 1.442695
      %v285 = vpow.pop %v284
      %v286 = vmul.f32 %v225, 1.442695
      %v287 = vpow.pop %v286
      %v288 = vmul.f32 %v163, 1.442695
      %v289 = vpow.pop %v288
      %v290 = vmul.f32 %v228, 1.442695
      %v291 = vpow.pop %v290
      %v292 = vmul.f32 %v166, 1.442695
      %v293 = vpow.pop %v292
      %v294 = vmul.f32 %v231, 1.442695
      %v295 = vpow.pop %v294
      %v296 = vmul.f32 %v169, 1.442695
      %v297 = vpow.pop %v296
      %v298 = vmul.f32 %v234, 1.442695
      %v299 = vpow.pop %v298
      %300 = vset.pattern.permute.xlu0 6
      %301 = vperm.xlu0 %300, %v39
      %v302 = vpop.permute.xlu0 %301
      %304 = vset.pattern.permute.xlu0 6
      %305 = vperm.xlu0 %304, %v40
      %v306 = vpop.permute.xlu0 %305
      %308 = vset.pattern.permute.xlu0 6
      %309 = vperm.xlu0 %308, %v41
      %v310 = vpop.permute.xlu0 %309
      %312 = vset.pattern.permute.xlu0 6
      %313 = vperm.xlu0 %312, %v42
      %v314 = vpop.permute.xlu0 %313
      %316 = vset.pattern.permute.xlu0 6
      %317 = vperm.xlu0 %316, %v43
      %v318 = vpop.permute.xlu0 %317
      %320 = vset.pattern.permute.xlu0 6
      %321 = vperm.xlu0 %320, %v44
      %v322 = vpop.permute.xlu0 %321
      %324 = vset.pattern.permute.xlu0 6
      %325 = vperm.xlu0 %324, %v45
      %v326 = vpop.permute.xlu0 %325
      %328 = vset.pattern.permute.xlu0 6
      %329 = vperm.xlu0 %328, %v46
      %v330 = vpop.permute.xlu0 %329
      %332 = vset.pattern.permute.xlu0 6
      %333 = vperm.xlu0 %332, %v47
      %v334 = vpop.permute.xlu0 %333
      %336 = vset.pattern.permute.xlu0 6
      %337 = vperm.xlu0 %336, %v48
      %v338 = vpop.permute.xlu0 %337
      %340 = vset.pattern.permute.xlu0 6
      %341 = vperm.xlu0 %340, %v49
      %v342 = vpop.permute.xlu0 %341
      %344 = vset.pattern.permute.xlu0 6
      %345 = vperm.xlu0 %344, %v50
      %v346 = vpop.permute.xlu0 %345
      %348 = vset.pattern.permute.xlu0 6
      %349 = vperm.xlu0 %348, %v51
      %v350 = vpop.permute.xlu0 %349
      %352 = vset.pattern.permute.xlu0 6
      %353 = vperm.xlu0 %352, %v52
      %v354 = vpop.permute.xlu0 %353
      %356 = vset.pattern.permute.xlu0 6
      %357 = vperm.xlu0 %356, %v53
      %v358 = vpop.permute.xlu0 %357
      %360 = vset.pattern.permute.xlu0 6
      %361 = vperm.xlu0 %360, %v54
      %v362 = vpop.permute.xlu0 %361
      %v364 = vmul.f32 %v302, %v237
      %v365 = vmul.f32 %v302, %v239
      %v366 = vmul.f32 %v306, %v241
      %v367 = vmul.f32 %v306, %v243
      %v368 = vmul.f32 %v310, %v245
      %v369 = vmul.f32 %v310, %v247
      %v370 = vmul.f32 %v314, %v249
      %v371 = vmul.f32 %v314, %v251
      %v372 = vmul.f32 %v318, %v253
      %v373 = vmul.f32 %v318, %v255
      %v374 = vmul.f32 %v322, %v257
      %v375 = vmul.f32 %v322, %v259
      %v376 = vmul.f32 %v326, %v261
      %v377 = vmul.f32 %v326, %v263
      %v378 = vmul.f32 %v330, %v265
      %v379 = vmul.f32 %v330, %v267
      %v380 = vmul.f32 %v334, %v269
      %v381 = vmul.f32 %v334, %v271
      %v382 = vmul.f32 %v338, %v273
      %v383 = vmul.f32 %v338, %v275
      %v384 = vmul.f32 %v342, %v277
      %v385 = vmul.f32 %v342, %v279
      %v386 = vmul.f32 %v346, %v281
      %v387 = vmul.f32 %v346, %v283
      %v388 = vmul.f32 %v350, %v285
      %v389 = vmul.f32 %v350, %v287
      %v390 = vmul.f32 %v354, %v289
      %v391 = vmul.f32 %v354, %v291
      %v392 = vmul.f32 %v358, %v293
      %v393 = vmul.f32 %v358, %v295
      %v394 = vmul.f32 %v362, %v297
      %v395 = vmul.f32 %v362, %v299
      %vm396 = vcmp.le.f32.partialorder %v124, 0.0
      %vm397 = vcmp.le.f32.partialorder %v189, 0.0
      %vm398 = vcmp.le.f32.partialorder %v127, 0.0
      %vm399 = vcmp.le.f32.partialorder %v192, 0.0
      %vm400 = vcmp.le.f32.partialorder %v130, 0.0
      %vm401 = vcmp.le.f32.partialorder %v195, 0.0
      %vm402 = vcmp.le.f32.partialorder %v133, 0.0
      %vm403 = vcmp.le.f32.partialorder %v198, 0.0
      %vm404 = vcmp.le.f32.partialorder %v136, 0.0
      %vm405 = vcmp.le.f32.partialorder %v201, 0.0
      %vm406 = vcmp.le.f32.partialorder %v139, 0.0
      %vm407 = vcmp.le.f32.partialorder %v204, 0.0
      %vm408 = vcmp.le.f32.partialorder %v142, 0.0
      %vm409 = vcmp.le.f32.partialorder %v207, 0.0
      %vm410 = vcmp.le.f32.partialorder %v145, 0.0
      %vm411 = vcmp.le.f32.partialorder %v210, 0.0
      %vm412 = vcmp.le.f32.partialorder %v148, 0.0
      %vm413 = vcmp.le.f32.partialorder %v213, 0.0
      %vm414 = vcmp.le.f32.partialorder %v151, 0.0
      %vm415 = vcmp.le.f32.partialorder %v216, 0.0
      %vm416 = vcmp.le.f32.partialorder %v154, 0.0
      %vm417 = vcmp.le.f32.partialorder %v219, 0.0
      %vm418 = vcmp.le.f32.partialorder %v157, 0.0
      %vm419 = vcmp.le.f32.partialorder %v222, 0.0
      %vm420 = vcmp.le.f32.partialorder %v160, 0.0
      %vm421 = vcmp.le.f32.partialorder %v225, 0.0
      %vm422 = vcmp.le.f32.partialorder %v163, 0.0
      %vm423 = vcmp.le.f32.partialorder %v228, 0.0
      %vm424 = vcmp.le.f32.partialorder %v166, 0.0
      %vm425 = vcmp.le.f32.partialorder %v231, 0.0
      %vm426 = vcmp.le.f32.partialorder %v169, 0.0
      %vm427 = vcmp.le.f32.partialorder %v234, 0.0
      %vm428 = vcmp.ge.f32.partialorder %v364, 0.003921569
      %vm429 = vcmp.ge.f32.partialorder %v365, 0.003921569
      %vm430 = vcmp.ge.f32.partialorder %v366, 0.003921569
      %vm431 = vcmp.ge.f32.partialorder %v367, 0.003921569
      %vm432 = vcmp.ge.f32.partialorder %v368, 0.003921569
      %vm433 = vcmp.ge.f32.partialorder %v369, 0.003921569
      %vm434 = vcmp.ge.f32.partialorder %v370, 0.003921569
      %vm435 = vcmp.ge.f32.partialorder %v371, 0.003921569
      %vm436 = vcmp.ge.f32.partialorder %v372, 0.003921569
      %vm437 = vcmp.ge.f32.partialorder %v373, 0.003921569
      %vm438 = vcmp.ge.f32.partialorder %v374, 0.003921569
      %vm439 = vcmp.ge.f32.partialorder %v375, 0.003921569
      %vm440 = vcmp.ge.f32.partialorder %v376, 0.003921569
      %vm441 = vcmp.ge.f32.partialorder %v377, 0.003921569
      %vm442 = vcmp.ge.f32.partialorder %v378, 0.003921569
      %vm443 = vcmp.ge.f32.partialorder %v379, 0.003921569
      %vm444 = vcmp.ge.f32.partialorder %v380, 0.003921569
      %vm445 = vcmp.ge.f32.partialorder %v381, 0.003921569
      %vm446 = vcmp.ge.f32.partialorder %v382, 0.003921569
      %vm447 = vcmp.ge.f32.partialorder %v383, 0.003921569
      %vm448 = vcmp.ge.f32.partialorder %v384, 0.003921569
      %vm449 = vcmp.ge.f32.partialorder %v385, 0.003921569
      %vm450 = vcmp.ge.f32.partialorder %v386, 0.003921569
      %vm451 = vcmp.ge.f32.partialorder %v387, 0.003921569
      %vm452 = vcmp.ge.f32.partialorder %v388, 0.003921569
      %vm453 = vcmp.ge.f32.partialorder %v389, 0.003921569
      %vm454 = vcmp.ge.f32.partialorder %v390, 0.003921569
      %vm455 = vcmp.ge.f32.partialorder %v391, 0.003921569
      %vm456 = vcmp.ge.f32.partialorder %v392, 0.003921569
      %vm457 = vcmp.ge.f32.partialorder %v393, 0.003921569
      %vm458 = vcmp.ge.f32.partialorder %v394, 0.003921569
      %vm459 = vcmp.ge.f32.partialorder %v395, 0.003921569
      %vm460 = vmand %vm396, %vm428
      %vm461 = vmand %vm397, %vm429
      %vm462 = vmand %vm398, %vm430
      %vm463 = vmand %vm399, %vm431
      %vm464 = vmand %vm400, %vm432
      %vm465 = vmand %vm401, %vm433
      %vm466 = vmand %vm402, %vm434
      %vm467 = vmand %vm403, %vm435
      %vm468 = vmand %vm404, %vm436
      %vm469 = vmand %vm405, %vm437
      %vm470 = vmand %vm406, %vm438
      %vm471 = vmand %vm407, %vm439
      %vm472 = vmand %vm408, %vm440
      %vm473 = vmand %vm409, %vm441
      %vm474 = vmand %vm410, %vm442
      %vm475 = vmand %vm411, %vm443
      %vm476 = vmand %vm412, %vm444
      %vm477 = vmand %vm413, %vm445
      %vm478 = vmand %vm414, %vm446
      %vm479 = vmand %vm415, %vm447
      %vm480 = vmand %vm416, %vm448
      %vm481 = vmand %vm417, %vm449
      %vm482 = vmand %vm418, %vm450
      %vm483 = vmand %vm419, %vm451
      %vm484 = vmand %vm420, %vm452
      %vm485 = vmand %vm421, %vm453
      %vm486 = vmand %vm422, %vm454
      %vm487 = vmand %vm423, %vm455
      %vm488 = vmand %vm424, %vm456
      %vm489 = vmand %vm425, %vm457
      %vm490 = vmand %vm426, %vm458
      %vm491 = vmand %vm427, %vm459
      %v492 = vmin.f32 %v364, 0.99
      %v493 = vmin.f32 %v365, 0.99
      %v494 = vmin.f32 %v366, 0.99
      %v495 = vmin.f32 %v367, 0.99
      %v496 = vmin.f32 %v368, 0.99
      %v497 = vmin.f32 %v369, 0.99
      %v498 = vmin.f32 %v370, 0.99
      %v499 = vmin.f32 %v371, 0.99
      %v500 = vmin.f32 %v372, 0.99
      %v501 = vmin.f32 %v373, 0.99
      %v502 = vmin.f32 %v374, 0.99
      %v503 = vmin.f32 %v375, 0.99
      %v504 = vmin.f32 %v376, 0.99
      %v505 = vmin.f32 %v377, 0.99
      %v506 = vmin.f32 %v378, 0.99
      %v507 = vmin.f32 %v379, 0.99
      %v508 = vmin.f32 %v380, 0.99
      %v509 = vmin.f32 %v381, 0.99
      %v510 = vmin.f32 %v382, 0.99
      %v511 = vmin.f32 %v383, 0.99
      %v512 = vmin.f32 %v384, 0.99
      %v513 = vmin.f32 %v385, 0.99
      %v514 = vmin.f32 %v386, 0.99
      %v515 = vmin.f32 %v387, 0.99
      %v516 = vmin.f32 %v388, 0.99
      %v517 = vmin.f32 %v389, 0.99
      %v518 = vmin.f32 %v390, 0.99
      %v519 = vmin.f32 %v391, 0.99
      %v520 = vmin.f32 %v392, 0.99
      %v521 = vmin.f32 %v393, 0.99
      %v522 = vmin.f32 %v394, 0.99
      %v523 = vmin.f32 %v395, 0.99
      %v524 = vsel %vm460, %v492, 0.0
      %v525 = vsel %vm461, %v493, 0.0
      %v526 = vsel %vm462, %v494, 0.0
      %v527 = vsel %vm463, %v495, 0.0
      %v528 = vsel %vm464, %v496, 0.0
      %v529 = vsel %vm465, %v497, 0.0
      %v530 = vsel %vm466, %v498, 0.0
      %v531 = vsel %vm467, %v499, 0.0
      %v532 = vsel %vm468, %v500, 0.0
      %v533 = vsel %vm469, %v501, 0.0
      %v534 = vsel %vm470, %v502, 0.0
      %v535 = vsel %vm471, %v503, 0.0
      %v536 = vsel %vm472, %v504, 0.0
      %v537 = vsel %vm473, %v505, 0.0
      %v538 = vsel %vm474, %v506, 0.0
      %v539 = vsel %vm475, %v507, 0.0
      %v540 = vsel %vm476, %v508, 0.0
      %v541 = vsel %vm477, %v509, 0.0
      %v542 = vsel %vm478, %v510, 0.0
      %v543 = vsel %vm479, %v511, 0.0
      %v544 = vsel %vm480, %v512, 0.0
      %v545 = vsel %vm481, %v513, 0.0
      %v546 = vsel %vm482, %v514, 0.0
      %v547 = vsel %vm483, %v515, 0.0
      %v548 = vsel %vm484, %v516, 0.0
      %v549 = vsel %vm485, %v517, 0.0
      %v550 = vsel %vm486, %v518, 0.0
      %v551 = vsel %vm487, %v519, 0.0
      %v552 = vsel %vm488, %v520, 0.0
      %v553 = vsel %vm489, %v521, 0.0
      %v554 = vsel %vm490, %v522, 0.0
      %v555 = vsel %vm491, %v523, 0.0
      %v556 = vsub.f32 1.0, %v524
      %v557 = vsub.f32 1.0, %v525
      %v558 = vsub.f32 1.0, %v526
      %v559 = vsub.f32 1.0, %v527
      %v560 = vsub.f32 1.0, %v528
      %v561 = vsub.f32 1.0, %v529
      %v562 = vsub.f32 1.0, %v530
      %v563 = vsub.f32 1.0, %v531
      %v564 = vsub.f32 1.0, %v532
      %v565 = vsub.f32 1.0, %v533
      %v566 = vsub.f32 1.0, %v534
      %v567 = vsub.f32 1.0, %v535
      %v568 = vsub.f32 1.0, %v536
      %v569 = vsub.f32 1.0, %v537
      %v570 = vsub.f32 1.0, %v538
      %v571 = vsub.f32 1.0, %v539
      %v572 = vsub.f32 1.0, %v540
      %v573 = vsub.f32 1.0, %v541
      %v574 = vsub.f32 1.0, %v542
      %v575 = vsub.f32 1.0, %v543
      %v576 = vsub.f32 1.0, %v544
      %v577 = vsub.f32 1.0, %v545
      %v578 = vsub.f32 1.0, %v546
      %v579 = vsub.f32 1.0, %v547
      %v580 = vsub.f32 1.0, %v548
      %v581 = vsub.f32 1.0, %v549
      %v582 = vsub.f32 1.0, %v550
      %v583 = vsub.f32 1.0, %v551
      %v584 = vsub.f32 1.0, %v552
      %v585 = vsub.f32 1.0, %v553
      %v586 = vsub.f32 1.0, %v554
      %v587 = vsub.f32 1.0, %v555
      %v588 = vlog2.pop %v556
      %v589 = vmul.f32 %v588, 0.6931472
      %v590 = vlog2.pop %v557
      %v591 = vmul.f32 %v590, 0.6931472
      %v592 = vlog2.pop %v558
      %v593 = vmul.f32 %v592, 0.6931472
      %v594 = vlog2.pop %v559
      %v595 = vmul.f32 %v594, 0.6931472
      %v596 = vlog2.pop %v560
      %v597 = vmul.f32 %v596, 0.6931472
      %v598 = vlog2.pop %v561
      %v599 = vmul.f32 %v598, 0.6931472
      %v600 = vlog2.pop %v562
      %v601 = vmul.f32 %v600, 0.6931472
      %v602 = vlog2.pop %v563
      %v603 = vmul.f32 %v602, 0.6931472
      %v604 = vlog2.pop %v564
      %v605 = vmul.f32 %v604, 0.6931472
      %v606 = vlog2.pop %v565
      %v607 = vmul.f32 %v606, 0.6931472
      %v608 = vlog2.pop %v566
      %v609 = vmul.f32 %v608, 0.6931472
      %v610 = vlog2.pop %v567
      %v611 = vmul.f32 %v610, 0.6931472
      %v612 = vlog2.pop %v568
      %v613 = vmul.f32 %v612, 0.6931472
      %v614 = vlog2.pop %v569
      %v615 = vmul.f32 %v614, 0.6931472
      %v616 = vlog2.pop %v570
      %v617 = vmul.f32 %v616, 0.6931472
      %v618 = vlog2.pop %v571
      %v619 = vmul.f32 %v618, 0.6931472
      %v620 = vlog2.pop %v572
      %v621 = vmul.f32 %v620, 0.6931472
      %v622 = vlog2.pop %v573
      %v623 = vmul.f32 %v622, 0.6931472
      %v624 = vlog2.pop %v574
      %v625 = vmul.f32 %v624, 0.6931472
      %v626 = vlog2.pop %v575
      %v627 = vmul.f32 %v626, 0.6931472
      %v628 = vlog2.pop %v576
      %v629 = vmul.f32 %v628, 0.6931472
      %v630 = vlog2.pop %v577
      %v631 = vmul.f32 %v630, 0.6931472
      %v632 = vlog2.pop %v578
      %v633 = vmul.f32 %v632, 0.6931472
      %v634 = vlog2.pop %v579
      %v635 = vmul.f32 %v634, 0.6931472
      %v636 = vlog2.pop %v580
      %v637 = vmul.f32 %v636, 0.6931472
      %v638 = vlog2.pop %v581
      %v639 = vmul.f32 %v638, 0.6931472
      %v640 = vlog2.pop %v582
      %v641 = vmul.f32 %v640, 0.6931472
      %v642 = vlog2.pop %v583
      %v643 = vmul.f32 %v642, 0.6931472
      %v644 = vlog2.pop %v584
      %v645 = vmul.f32 %v644, 0.6931472
      %v646 = vlog2.pop %v585
      %v647 = vmul.f32 %v646, 0.6931472
      %v648 = vlog2.pop %v586
      %v649 = vmul.f32 %v648, 0.6931472
      %v650 = vlog2.pop %v587
      %v651 = vmul.f32 %v650, 0.6931472
      %v652 = vlaneseq
      %v653 = vshrl.u32 %v652, 7
      %v654 = vadd.s32 %v653, 8
      %v655 = vadd.s32 %v653, 16
      %v656 = vadd.s32 %v653, 24
      %v657 = vadd.s32 %v653, 32
      %v658 = vadd.s32 %v653, 40
      %v659 = vadd.s32 %v653, 48
      %v660 = vadd.s32 %v653, 56
      %v661 = vadd.s32 %v653, 64
      %v662 = vadd.s32 %v653, 72
      %v663 = vadd.s32 %v653, 80
      %v664 = vadd.s32 %v653, 88
      %v665 = vadd.s32 %v653, 96
      %v666 = vadd.s32 %v653, 104
      %v667 = vadd.s32 %v653, 112
      %v668 = vadd.s32 %v653, 120
      %v669 = vlaneseq
      %v670 = vand.u32 %v669, 127
      %vm671 = vcmp.lt.s32.totalorder %v670, %v653
      %vm672 = vcmp.lt.s32.totalorder %v670, %v654
      %vm673 = vcmp.lt.s32.totalorder %v670, %v655
      %vm674 = vcmp.lt.s32.totalorder %v670, %v656
      %vm675 = vcmp.lt.s32.totalorder %v670, %v657
      %vm676 = vcmp.lt.s32.totalorder %v670, %v658
      %vm677 = vcmp.lt.s32.totalorder %v670, %v659
      %vm678 = vcmp.lt.s32.totalorder %v670, %v660
      %vm679 = vcmp.lt.s32.totalorder %v670, %v661
      %vm680 = vcmp.lt.s32.totalorder %v670, %v662
      %vm681 = vcmp.lt.s32.totalorder %v670, %v663
      %vm682 = vcmp.lt.s32.totalorder %v670, %v664
      %vm683 = vcmp.lt.s32.totalorder %v670, %v665
      %vm684 = vcmp.lt.s32.totalorder %v670, %v666
      %vm685 = vcmp.lt.s32.totalorder %v670, %v667
      %vm686 = vcmp.lt.s32.totalorder %v670, %v668
      %v687 = vsel %vm671, 1, 0
      %v688 = vsel %vm672, 1, 0
      %v689 = vsel %vm673, 1, 0
      %v690 = vsel %vm674, 1, 0
      %v691 = vsel %vm675, 1, 0
      %v692 = vsel %vm676, 1, 0
      %v693 = vsel %vm677, 1, 0
      %v694 = vsel %vm678, 1, 0
      %v695 = vsel %vm679, 1, 0
      %v696 = vsel %vm680, 1, 0
      %v697 = vsel %vm681, 1, 0
      %v698 = vsel %vm682, 1, 0
      %v699 = vsel %vm683, 1, 0
      %v700 = vsel %vm684, 1, 0
      %v701 = vsel %vm685, 1, 0
      %v702 = vsel %vm686, 1, 0
      %v703 = vcvt.s32.f32 %v687
      %v704 = vcvt.s32.f32 %v688
      %v705 = vcvt.s32.f32 %v689
      %v706 = vcvt.s32.f32 %v690
      %v707 = vcvt.s32.f32 %v691
      %v708 = vcvt.s32.f32 %v692
      %v709 = vcvt.s32.f32 %v693
      %v710 = vcvt.s32.f32 %v694
      %v711 = vcvt.s32.f32 %v695
      %v712 = vcvt.s32.f32 %v696
      %v713 = vcvt.s32.f32 %v697
      %v714 = vcvt.s32.f32 %v698
      %v715 = vcvt.s32.f32 %v699
      %v716 = vcvt.s32.f32 %v700
      %v717 = vcvt.s32.f32 %v701
      %v718 = vcvt.s32.f32 %v702
      %719 = vmatpush.msra.mxu0 %v649
      %720 = vmatpush.msra.mxu0 %v645
      %721 = vmatpush.msra.mxu0 %v641
      %722 = vmatpush.msra.mxu0 %v637
      %723 = vmatpush.msra.mxu0 %v633
      %724 = vmatpush.msra.mxu0 %v629
      %725 = vmatpush.msra.mxu0 %v625
      %726 = vmatpush.msra.mxu0 %v621
      %727 = vmatpush.msra.mxu0 %v617
      %728 = vmatpush.msra.mxu0 %v613
      %729 = vmatpush.msra.mxu0 %v609
      %730 = vmatpush.msra.mxu0 %v605
      %731 = vmatpush.msra.mxu0 %v601
      %732 = vmatpush.msra.mxu0 %v597
      %733 = vmatpush.msra.mxu0 %v593
      %734 = vmatpush.msra.mxu0 %v589
      %735 = vmatmul.f32.gmra.mxu0 %v703
      %v736 = vpop.f32.mrf.mxu0
      %v737 = vadd.f32 0.0, %v736
      %738 = vmatmul.f32.gmra.mxu0 %v704
      %v739 = vpop.f32.mrf.mxu0
      %v740 = vadd.f32 0.0, %v739
      %741 = vmatmul.f32.gmra.mxu0 %v705
      %v742 = vpop.f32.mrf.mxu0
      %v743 = vadd.f32 0.0, %v742
      %744 = vmatmul.f32.gmra.mxu0 %v706
      %v745 = vpop.f32.mrf.mxu0
      %v746 = vadd.f32 0.0, %v745
      %747 = vmatmul.f32.gmra.mxu0 %v707
      %v748 = vpop.f32.mrf.mxu0
      %v749 = vadd.f32 0.0, %v748
      %750 = vmatmul.f32.gmra.mxu0 %v708
      %v751 = vpop.f32.mrf.mxu0
      %v752 = vadd.f32 0.0, %v751
      %753 = vmatmul.f32.gmra.mxu0 %v709
      %v754 = vpop.f32.mrf.mxu0
      %v755 = vadd.f32 0.0, %v754
      %756 = vmatmul.f32.gmra.mxu0 %v710
      %v757 = vpop.f32.mrf.mxu0
      %v758 = vadd.f32 0.0, %v757
      %759 = vmatmul.f32.gmra.mxu0 %v711
      %v760 = vpop.f32.mrf.mxu0
      %v761 = vadd.f32 0.0, %v760
      %762 = vmatmul.f32.gmra.mxu0 %v712
      %v763 = vpop.f32.mrf.mxu0
      %v764 = vadd.f32 0.0, %v763
      %765 = vmatmul.f32.gmra.mxu0 %v713
      %v766 = vpop.f32.mrf.mxu0
      %v767 = vadd.f32 0.0, %v766
      %768 = vmatmul.f32.gmra.mxu0 %v714
      %v769 = vpop.f32.mrf.mxu0
      %v770 = vadd.f32 0.0, %v769
      %771 = vmatmul.f32.gmra.mxu0 %v715
      %v772 = vpop.f32.mrf.mxu0
      %v773 = vadd.f32 0.0, %v772
      %774 = vmatmul.f32.gmra.mxu0 %v716
      %v775 = vpop.f32.mrf.mxu0
      %v776 = vadd.f32 0.0, %v775
      %777 = vmatmul.f32.gmra.mxu0 %v717
      %v778 = vpop.f32.mrf.mxu0
      %v779 = vadd.f32 0.0, %v778
      %780 = vmatmul.f32.gmra.mxu0 %v718
      %v781 = vpop.f32.mrf.mxu0
      %v782 = vadd.f32 0.0, %v781
      %783 = vdwg.mxu0
      %784 = vmatpush.msra.mxu0 %v651
      %785 = vmatpush.msra.mxu0 %v647
      %786 = vmatpush.msra.mxu0 %v643
      %787 = vmatpush.msra.mxu0 %v639
      %788 = vmatpush.msra.mxu0 %v635
      %789 = vmatpush.msra.mxu0 %v631
      %790 = vmatpush.msra.mxu0 %v627
      %791 = vmatpush.msra.mxu0 %v623
      %792 = vmatpush.msra.mxu0 %v619
      %793 = vmatpush.msra.mxu0 %v615
      %794 = vmatpush.msra.mxu0 %v611
      %795 = vmatpush.msra.mxu0 %v607
      %796 = vmatpush.msra.mxu0 %v603
      %797 = vmatpush.msra.mxu0 %v599
      %798 = vmatpush.msra.mxu0 %v595
      %799 = vmatpush.msra.mxu0 %v591
      %800 = vmatmul.f32.gmra.mxu0 %v703
      %v801 = vpop.f32.mrf.mxu0
      %v802 = vadd.f32 0.0, %v801
      %803 = vmatmul.f32.gmra.mxu0 %v704
      %v804 = vpop.f32.mrf.mxu0
      %v805 = vadd.f32 0.0, %v804
      %806 = vmatmul.f32.gmra.mxu0 %v705
      %v807 = vpop.f32.mrf.mxu0
      %v808 = vadd.f32 0.0, %v807
      %809 = vmatmul.f32.gmra.mxu0 %v706
      %v810 = vpop.f32.mrf.mxu0
      %v811 = vadd.f32 0.0, %v810
      %812 = vmatmul.f32.gmra.mxu0 %v707
      %v813 = vpop.f32.mrf.mxu0
      %v814 = vadd.f32 0.0, %v813
      %815 = vmatmul.f32.gmra.mxu0 %v708
      %v816 = vpop.f32.mrf.mxu0
      %v817 = vadd.f32 0.0, %v816
      %818 = vmatmul.f32.gmra.mxu0 %v709
      %v819 = vpop.f32.mrf.mxu0
      %v820 = vadd.f32 0.0, %v819
      %821 = vmatmul.f32.gmra.mxu0 %v710
      %v822 = vpop.f32.mrf.mxu0
      %v823 = vadd.f32 0.0, %v822
      %824 = vmatmul.f32.gmra.mxu0 %v711
      %v825 = vpop.f32.mrf.mxu0
      %v826 = vadd.f32 0.0, %v825
      %827 = vmatmul.f32.gmra.mxu0 %v712
      %v828 = vpop.f32.mrf.mxu0
      %v829 = vadd.f32 0.0, %v828
      %830 = vmatmul.f32.gmra.mxu0 %v713
      %v831 = vpop.f32.mrf.mxu0
      %v832 = vadd.f32 0.0, %v831
      %833 = vmatmul.f32.gmra.mxu0 %v714
      %v834 = vpop.f32.mrf.mxu0
      %v835 = vadd.f32 0.0, %v834
      %836 = vmatmul.f32.gmra.mxu0 %v715
      %v837 = vpop.f32.mrf.mxu0
      %v838 = vadd.f32 0.0, %v837
      %839 = vmatmul.f32.gmra.mxu0 %v716
      %v840 = vpop.f32.mrf.mxu0
      %v841 = vadd.f32 0.0, %v840
      %842 = vmatmul.f32.gmra.mxu0 %v717
      %v843 = vpop.f32.mrf.mxu0
      %v844 = vadd.f32 0.0, %v843
      %845 = vmatmul.f32.gmra.mxu0 %v718
      %v846 = vpop.f32.mrf.mxu0
      %v847 = vadd.f32 0.0, %v846
      %848 = vdwg.mxu0
      %v849 = vld [vmem:[#allocation3] sm:$0x3]
      %v851 = vperm.slane %v849, 0
      %v852 = vperm.slane %v849, 1
      %v855 = vadd.f32 %v851, %v737
      %v856 = vadd.f32 %v852, %v802
      %v857 = vadd.f32 %v851, %v740
      %v858 = vadd.f32 %v852, %v805
      %v859 = vadd.f32 %v851, %v743
      %v860 = vadd.f32 %v852, %v808
      %v861 = vadd.f32 %v851, %v746
      %v862 = vadd.f32 %v852, %v811
      %v863 = vadd.f32 %v851, %v749
      %v864 = vadd.f32 %v852, %v814
      %v865 = vadd.f32 %v851, %v752
      %v866 = vadd.f32 %v852, %v817
      %v867 = vadd.f32 %v851, %v755
      %v868 = vadd.f32 %v852, %v820
      %v869 = vadd.f32 %v851, %v758
      %v870 = vadd.f32 %v852, %v823
      %v871 = vadd.f32 %v851, %v761
      %v872 = vadd.f32 %v852, %v826
      %v873 = vadd.f32 %v851, %v764
      %v874 = vadd.f32 %v852, %v829
      %v875 = vadd.f32 %v851, %v767
      %v876 = vadd.f32 %v852, %v832
      %v877 = vadd.f32 %v851, %v770
      %v878 = vadd.f32 %v852, %v835
      %v879 = vadd.f32 %v851, %v773
      %v880 = vadd.f32 %v852, %v838
      %v881 = vadd.f32 %v851, %v776
      %v882 = vadd.f32 %v852, %v841
      %v883 = vadd.f32 %v851, %v779
      %v884 = vadd.f32 %v852, %v844
      %v885 = vadd.f32 %v851, %v782
      %v886 = vadd.f32 %v852, %v847
      %v887 = vadd.f32 %v855, %v589
      %v888 = vadd.f32 %v856, %v591
      %v889 = vadd.f32 %v857, %v593
      %v890 = vadd.f32 %v858, %v595
      %v891 = vadd.f32 %v859, %v597
      %v892 = vadd.f32 %v860, %v599
      %v893 = vadd.f32 %v861, %v601
      %v894 = vadd.f32 %v862, %v603
      %v895 = vadd.f32 %v863, %v605
      %v896 = vadd.f32 %v864, %v607
      %v897 = vadd.f32 %v865, %v609
      %v898 = vadd.f32 %v866, %v611
      %v899 = vadd.f32 %v867, %v613
      %v900 = vadd.f32 %v868, %v615
      %v901 = vadd.f32 %v869, %v617
      %v902 = vadd.f32 %v870, %v619
      %v903 = vadd.f32 %v871, %v621
      %v904 = vadd.f32 %v872, %v623
      %v905 = vadd.f32 %v873, %v625
      %v906 = vadd.f32 %v874, %v627
      %v907 = vadd.f32 %v875, %v629
      %v908 = vadd.f32 %v876, %v631
      %v909 = vadd.f32 %v877, %v633
      %v910 = vadd.f32 %v878, %v635
      %v911 = vadd.f32 %v879, %v637
      %v912 = vadd.f32 %v880, %v639
      %v913 = vadd.f32 %v881, %v641
      %v914 = vadd.f32 %v882, %v643
      %v915 = vadd.f32 %v883, %v645
      %v916 = vadd.f32 %v884, %v647
      %v917 = vadd.f32 %v885, %v649
      %v918 = vadd.f32 %v886, %v651
      %vm919 = vcmp.ge.f32.partialorder %v887, -9.2103405
      %vm920 = vcmp.ge.f32.partialorder %v888, -9.2103405
      %vm921 = vcmp.ge.f32.partialorder %v889, -9.2103405
      %vm922 = vcmp.ge.f32.partialorder %v890, -9.2103405
      %vm923 = vcmp.ge.f32.partialorder %v891, -9.2103405
      %vm924 = vcmp.ge.f32.partialorder %v892, -9.2103405
      %vm925 = vcmp.ge.f32.partialorder %v893, -9.2103405
      %vm926 = vcmp.ge.f32.partialorder %v894, -9.2103405
      %vm927 = vcmp.ge.f32.partialorder %v895, -9.2103405
      %vm928 = vcmp.ge.f32.partialorder %v896, -9.2103405
      %vm929 = vcmp.ge.f32.partialorder %v897, -9.2103405
      %vm930 = vcmp.ge.f32.partialorder %v898, -9.2103405
      %vm931 = vcmp.ge.f32.partialorder %v899, -9.2103405
      %vm932 = vcmp.ge.f32.partialorder %v900, -9.2103405
      %vm933 = vcmp.ge.f32.partialorder %v901, -9.2103405
      %vm934 = vcmp.ge.f32.partialorder %v902, -9.2103405
      %vm935 = vcmp.ge.f32.partialorder %v903, -9.2103405
      %vm936 = vcmp.ge.f32.partialorder %v904, -9.2103405
      %vm937 = vcmp.ge.f32.partialorder %v905, -9.2103405
      %vm938 = vcmp.ge.f32.partialorder %v906, -9.2103405
      %vm939 = vcmp.ge.f32.partialorder %v907, -9.2103405
      %vm940 = vcmp.ge.f32.partialorder %v908, -9.2103405
      %vm941 = vcmp.ge.f32.partialorder %v909, -9.2103405
      %vm942 = vcmp.ge.f32.partialorder %v910, -9.2103405
      %vm943 = vcmp.ge.f32.partialorder %v911, -9.2103405
      %vm944 = vcmp.ge.f32.partialorder %v912, -9.2103405
      %vm945 = vcmp.ge.f32.partialorder %v913, -9.2103405
      %vm946 = vcmp.ge.f32.partialorder %v914, -9.2103405
      %vm947 = vcmp.ge.f32.partialorder %v915, -9.2103405
      %vm948 = vcmp.ge.f32.partialorder %v916, -9.2103405
      %vm949 = vcmp.ge.f32.partialorder %v917, -9.2103405
      %vm950 = vcmp.ge.f32.partialorder %v918, -9.2103405
      %v951 = vmul.f32 %v855, 1.442695
      %v952 = vpow.pop %v951
      %v953 = vmul.f32 %v856, 1.442695
      %v954 = vpow.pop %v953
      %v955 = vmul.f32 %v857, 1.442695
      %v956 = vpow.pop %v955
      %v957 = vmul.f32 %v858, 1.442695
      %v958 = vpow.pop %v957
      %v959 = vmul.f32 %v859, 1.442695
      %v960 = vpow.pop %v959
      %v961 = vmul.f32 %v860, 1.442695
      %v962 = vpow.pop %v961
      %v963 = vmul.f32 %v861, 1.442695
      %v964 = vpow.pop %v963
      %v965 = vmul.f32 %v862, 1.442695
      %v966 = vpow.pop %v965
      %v967 = vmul.f32 %v863, 1.442695
      %v968 = vpow.pop %v967
      %v969 = vmul.f32 %v864, 1.442695
      %v970 = vpow.pop %v969
      %v971 = vmul.f32 %v865, 1.442695
      %v972 = vpow.pop %v971
      %v973 = vmul.f32 %v866, 1.442695
      %v974 = vpow.pop %v973
      %v975 = vmul.f32 %v867, 1.442695
      %v976 = vpow.pop %v975
      %v977 = vmul.f32 %v868, 1.442695
      %v978 = vpow.pop %v977
      %v979 = vmul.f32 %v869, 1.442695
      %v980 = vpow.pop %v979
      %v981 = vmul.f32 %v870, 1.442695
      %v982 = vpow.pop %v981
      %v983 = vmul.f32 %v871, 1.442695
      %v984 = vpow.pop %v983
      %v985 = vmul.f32 %v872, 1.442695
      %v986 = vpow.pop %v985
      %v987 = vmul.f32 %v873, 1.442695
      %v988 = vpow.pop %v987
      %v989 = vmul.f32 %v874, 1.442695
      %v990 = vpow.pop %v989
      %v991 = vmul.f32 %v875, 1.442695
      %v992 = vpow.pop %v991
      %v993 = vmul.f32 %v876, 1.442695
      %v994 = vpow.pop %v993
      %v995 = vmul.f32 %v877, 1.442695
      %v996 = vpow.pop %v995
      %v997 = vmul.f32 %v878, 1.442695
      %v998 = vpow.pop %v997
      %v999 = vmul.f32 %v879, 1.442695
      %v1000 = vpow.pop %v999
      %v1001 = vmul.f32 %v880, 1.442695
      %v1002 = vpow.pop %v1001
      %v1003 = vmul.f32 %v881, 1.442695
      %v1004 = vpow.pop %v1003
      %v1005 = vmul.f32 %v882, 1.442695
      %v1006 = vpow.pop %v1005
      %v1007 = vmul.f32 %v883, 1.442695
      %v1008 = vpow.pop %v1007
      %v1009 = vmul.f32 %v884, 1.442695
      %v1010 = vpow.pop %v1009
      %v1011 = vmul.f32 %v885, 1.442695
      %v1012 = vpow.pop %v1011
      %v1013 = vmul.f32 %v886, 1.442695
      %v1014 = vpow.pop %v1013
      %v1015 = vmul.f32 %v524, %v952
      %v1016 = vmul.f32 %v525, %v954
      %v1017 = vmul.f32 %v526, %v956
      %v1018 = vmul.f32 %v527, %v958
      %v1019 = vmul.f32 %v528, %v960
      %v1020 = vmul.f32 %v529, %v962
      %v1021 = vmul.f32 %v530, %v964
      %v1022 = vmul.f32 %v531, %v966
      %v1023 = vmul.f32 %v532, %v968
      %v1024 = vmul.f32 %v533, %v970
      %v1025 = vmul.f32 %v534, %v972
      %v1026 = vmul.f32 %v535, %v974
      %v1027 = vmul.f32 %v536, %v976
      %v1028 = vmul.f32 %v537, %v978
      %v1029 = vmul.f32 %v538, %v980
      %v1030 = vmul.f32 %v539, %v982
      %v1031 = vmul.f32 %v540, %v984
      %v1032 = vmul.f32 %v541, %v986
      %v1033 = vmul.f32 %v542, %v988
      %v1034 = vmul.f32 %v543, %v990
      %v1035 = vmul.f32 %v544, %v992
      %v1036 = vmul.f32 %v545, %v994
      %v1037 = vmul.f32 %v546, %v996
      %v1038 = vmul.f32 %v547, %v998
      %v1039 = vmul.f32 %v548, %v1000
      %v1040 = vmul.f32 %v549, %v1002
      %v1041 = vmul.f32 %v550, %v1004
      %v1042 = vmul.f32 %v551, %v1006
      %v1043 = vmul.f32 %v552, %v1008
      %v1044 = vmul.f32 %v553, %v1010
      %v1045 = vmul.f32 %v554, %v1012
      %v1046 = vmul.f32 %v555, %v1014
      %v1047 = vsel %vm919, %v1015, 0.0
      %v1048 = vsel %vm920, %v1016, 0.0
      %v1049 = vsel %vm921, %v1017, 0.0
      %v1050 = vsel %vm922, %v1018, 0.0
      %v1051 = vsel %vm923, %v1019, 0.0
      %v1052 = vsel %vm924, %v1020, 0.0
      %v1053 = vsel %vm925, %v1021, 0.0
      %v1054 = vsel %vm926, %v1022, 0.0
      %v1055 = vsel %vm927, %v1023, 0.0
      %v1056 = vsel %vm928, %v1024, 0.0
      %v1057 = vsel %vm929, %v1025, 0.0
      %v1058 = vsel %vm930, %v1026, 0.0
      %v1059 = vsel %vm931, %v1027, 0.0
      %v1060 = vsel %vm932, %v1028, 0.0
      %v1061 = vsel %vm933, %v1029, 0.0
      %v1062 = vsel %vm934, %v1030, 0.0
      %v1063 = vsel %vm935, %v1031, 0.0
      %v1064 = vsel %vm936, %v1032, 0.0
      %v1065 = vsel %vm937, %v1033, 0.0
      %v1066 = vsel %vm938, %v1034, 0.0
      %v1067 = vsel %vm939, %v1035, 0.0
      %v1068 = vsel %vm940, %v1036, 0.0
      %v1069 = vsel %vm941, %v1037, 0.0
      %v1070 = vsel %vm942, %v1038, 0.0
      %v1071 = vsel %vm943, %v1039, 0.0
      %v1072 = vsel %vm944, %v1040, 0.0
      %v1073 = vsel %vm945, %v1041, 0.0
      %v1074 = vsel %vm946, %v1042, 0.0
      %v1075 = vsel %vm947, %v1043, 0.0
      %v1076 = vsel %vm948, %v1044, 0.0
      %v1077 = vsel %vm949, %v1045, 0.0
      %v1078 = vsel %vm950, %v1046, 0.0
      %v1079 = vld [vmem:[#allocation2] sm:$0xff]
      %v1080 = vld [vmem:[#allocation2 + $0x8] sm:$0xff]
      %v1081 = vld [vmem:[#allocation2 + $0x10] sm:$0xff]
      %v1082 = vld [vmem:[#allocation2 + $0x18] sm:$0xff]
      %v1083 = vld [vmem:[%s2] sm:$0xff]
      %v1084 = vld [vmem:[%s2 + $0x8] sm:$0xff]
      %1085 = vmatpush.msra.mxu0 %v1077
      %1086 = vmatpush.msra.mxu0 %v1075
      %1087 = vmatpush.msra.mxu0 %v1073
      %1088 = vmatpush.msra.mxu0 %v1071
      %1089 = vmatpush.msra.mxu0 %v1069
      %1090 = vmatpush.msra.mxu0 %v1067
      %1091 = vmatpush.msra.mxu0 %v1065
      %1092 = vmatpush.msra.mxu0 %v1063
      %1093 = vmatpush.msra.mxu0 %v1061
      %1094 = vmatpush.msra.mxu0 %v1059
      %1095 = vmatpush.msra.mxu0 %v1057
      %1096 = vmatpush.msra.mxu0 %v1055
      %1097 = vmatpush.msra.mxu0 %v1053
      %1098 = vmatpush.msra.mxu0 %v1051
      %1099 = vmatpush.msra.mxu0 %v1049
      %1100 = vmatpush.msra.mxu0 %v1047
      %1101 = vmatmul.f32.gmra.mxu0 %v1083
      %v1102 = vpop.f32.mrf.mxu0
      %v1103 = vadd.f32 0.0, %v1102
      %1104 = vmatmul.f32.gmra.mxu0 %v1084
      %v1105 = vpop.f32.mrf.mxu0
      %v1106 = vadd.f32 0.0, %v1105
      %1107 = vdwg.mxu0
      %1108 = vmatpush.msra.mxu0 %v1078
      %1109 = vmatpush.msra.mxu0 %v1076
      %1110 = vmatpush.msra.mxu0 %v1074
      %1111 = vmatpush.msra.mxu0 %v1072
      %1112 = vmatpush.msra.mxu0 %v1070
      %1113 = vmatpush.msra.mxu0 %v1068
      %1114 = vmatpush.msra.mxu0 %v1066
      %1115 = vmatpush.msra.mxu0 %v1064
      %1116 = vmatpush.msra.mxu0 %v1062
      %1117 = vmatpush.msra.mxu0 %v1060
      %1118 = vmatpush.msra.mxu0 %v1058
      %1119 = vmatpush.msra.mxu0 %v1056
      %1120 = vmatpush.msra.mxu0 %v1054
      %1121 = vmatpush.msra.mxu0 %v1052
      %1122 = vmatpush.msra.mxu0 %v1050
      %1123 = vmatpush.msra.mxu0 %v1048
      %1124 = vmatmul.f32.gmra.mxu0 %v1083
      %v1125 = vpop.f32.mrf.mxu0
      %v1126 = vadd.f32 0.0, %v1125
      %1127 = vmatmul.f32.gmra.mxu0 %v1084
      %v1128 = vpop.f32.mrf.mxu0
      %v1129 = vadd.f32 0.0, %v1128
      %1130 = vdwg.mxu0
      %v1131 = vadd.f32 %v1079, %v1103
      %v1132 = vadd.f32 %v1080, %v1126
      %v1133 = vadd.f32 %v1081, %v1106
      %v1134 = vadd.f32 %v1082, %v1129
      %1135 = vst [vmem:[#allocation2] sm:$0xff] %v1131
      %1136 = vst [vmem:[#allocation2 + $0x8] sm:$0xff] %v1132
      %1137 = vst [vmem:[#allocation2 + $0x10] sm:$0xff] %v1133
      %1138 = vst [vmem:[#allocation2 + $0x18] sm:$0xff] %v1134
      %v1139 = vld [vmem:[#allocation3] sm:$0x3]
      %v1140 = vadd.f32 %v589, %v593
      %v1141 = vadd.f32 %v1140, %v597
      %v1142 = vadd.f32 %v1141, %v601
      %v1143 = vadd.f32 %v1142, %v605
      %v1144 = vadd.f32 %v1143, %v609
      %v1145 = vadd.f32 %v1144, %v613
      %v1146 = vadd.f32 %v1145, %v617
      %v1147 = vadd.f32 %v1146, %v621
      %v1148 = vadd.f32 %v1147, %v625
      %v1149 = vadd.f32 %v1148, %v629
      %v1150 = vadd.f32 %v1149, %v633
      %v1151 = vadd.f32 %v1150, %v637
      %v1152 = vadd.f32 %v1151, %v641
      %v1153 = vadd.f32 %v1152, %v645
      %v1154 = vadd.f32 %v1153, %v649
      %v1155 = vrot.slane %v1154, 4
      %v1156 = vadd.f32 %v1154, %v1155
      %v1157 = vrot.slane %v1156, 2
      %v1158 = vadd.f32 %v1156, %v1157
      %v1159 = vrot.slane %v1158, 1
      %v1160 = vadd.f32 %v1158, %v1159
      %v1161 = vadd.f32 %v591, %v595
      %v1162 = vadd.f32 %v1161, %v599
      %v1163 = vadd.f32 %v1162, %v603
      %v1164 = vadd.f32 %v1163, %v607
      %v1165 = vadd.f32 %v1164, %v611
      %v1166 = vadd.f32 %v1165, %v615
      %v1167 = vadd.f32 %v1166, %v619
      %v1168 = vadd.f32 %v1167, %v623
      %v1169 = vadd.f32 %v1168, %v627
      %v1170 = vadd.f32 %v1169, %v631
      %v1171 = vadd.f32 %v1170, %v635
      %v1172 = vadd.f32 %v1171, %v639
      %v1173 = vadd.f32 %v1172, %v643
      %v1174 = vadd.f32 %v1173, %v647
      %v1175 = vadd.f32 %v1174, %v651
      %v1176 = vrot.slane %v1175, 4
      %v1177 = vadd.f32 %v1175, %v1176
      %v1178 = vrot.slane %v1177, 2
      %v1179 = vadd.f32 %v1177, %v1178
      %v1180 = vrot.slane %v1179, 1
      %v1181 = vadd.f32 %v1179, %v1180
      %v1184 = vrot.slane %v1181, 7
      %vm1185 = vcmask 1040384
      %v1186 = vsel %vm1185, %v1160, %v1184
      %v1188 = vadd.f32 %v1139, %v1186
      %v1189 = vlaneseq
      %vm1190 = vcmp.ge.s32.totalorder %v1189, 0
      %vm1191 = vcmp.lt.s32.totalorder %v1189, 256
      %vm1192 = vmand %vm1190, %vm1191
      %1193 = vst.msk [vmem:[#allocation3] sm:$0x3] %vm1192, %v1188
      %v1194 = vld [vmem:[#allocation4] sm:$0x3]
      %v1195 = vsel %vm919, %v589, 0.0
      %v1196 = vsel %vm920, %v591, 0.0
      %v1197 = vsel %vm921, %v593, 0.0
      %v1198 = vsel %vm922, %v595, 0.0
      %v1199 = vsel %vm923, %v597, 0.0
      %v1200 = vsel %vm924, %v599, 0.0
      %v1201 = vsel %vm925, %v601, 0.0
      %v1202 = vsel %vm926, %v603, 0.0
      %v1203 = vsel %vm927, %v605, 0.0
      %v1204 = vsel %vm928, %v607, 0.0
      %v1205 = vsel %vm929, %v609, 0.0
      %v1206 = vsel %vm930, %v611, 0.0
      %v1207 = vsel %vm931, %v613, 0.0
      %v1208 = vsel %vm932, %v615, 0.0
      %v1209 = vsel %vm933, %v617, 0.0
      %v1210 = vsel %vm934, %v619, 0.0
      %v1211 = vsel %vm935, %v621, 0.0
      %v1212 = vsel %vm936, %v623, 0.0
      %v1213 = vsel %vm937, %v625, 0.0
      %v1214 = vsel %vm938, %v627, 0.0
      %v1215 = vsel %vm939, %v629, 0.0
      %v1216 = vsel %vm940, %v631, 0.0
      %v1217 = vsel %vm941, %v633, 0.0
      %v1218 = vsel %vm942, %v635, 0.0
      %v1219 = vsel %vm943, %v637, 0.0
      %v1220 = vsel %vm944, %v639, 0.0
      %v1221 = vsel %vm945, %v641, 0.0
      %v1222 = vsel %vm946, %v643, 0.0
      %v1223 = vsel %vm947, %v645, 0.0
      %v1224 = vsel %vm948, %v647, 0.0
      %v1225 = vsel %vm949, %v649, 0.0
      %v1226 = vsel %vm950, %v651, 0.0
      %v1227 = vadd.f32 %v1195, %v1197
      %v1228 = vadd.f32 %v1227, %v1199
      %v1229 = vadd.f32 %v1228, %v1201
      %v1230 = vadd.f32 %v1229, %v1203
      %v1231 = vadd.f32 %v1230, %v1205
      %v1232 = vadd.f32 %v1231, %v1207
      %v1233 = vadd.f32 %v1232, %v1209
      %v1234 = vadd.f32 %v1233, %v1211
      %v1235 = vadd.f32 %v1234, %v1213
      %v1236 = vadd.f32 %v1235, %v1215
      %v1237 = vadd.f32 %v1236, %v1217
      %v1238 = vadd.f32 %v1237, %v1219
      %v1239 = vadd.f32 %v1238, %v1221
      %v1240 = vadd.f32 %v1239, %v1223
      %v1241 = vadd.f32 %v1240, %v1225
      %v1242 = vrot.slane %v1241, 4
      %v1243 = vadd.f32 %v1241, %v1242
      %v1244 = vrot.slane %v1243, 2
      %v1245 = vadd.f32 %v1243, %v1244
      %v1246 = vrot.slane %v1245, 1
      %v1247 = vadd.f32 %v1245, %v1246
      %v1248 = vadd.f32 %v1196, %v1198
      %v1249 = vadd.f32 %v1248, %v1200
      %v1250 = vadd.f32 %v1249, %v1202
      %v1251 = vadd.f32 %v1250, %v1204
      %v1252 = vadd.f32 %v1251, %v1206
      %v1253 = vadd.f32 %v1252, %v1208
      %v1254 = vadd.f32 %v1253, %v1210
      %v1255 = vadd.f32 %v1254, %v1212
      %v1256 = vadd.f32 %v1255, %v1214
      %v1257 = vadd.f32 %v1256, %v1216
      %v1258 = vadd.f32 %v1257, %v1218
      %v1259 = vadd.f32 %v1258, %v1220
      %v1260 = vadd.f32 %v1259, %v1222
      %v1261 = vadd.f32 %v1260, %v1224
      %v1262 = vadd.f32 %v1261, %v1226
      %v1263 = vrot.slane %v1262, 4
      %v1264 = vadd.f32 %v1262, %v1263
      %v1265 = vrot.slane %v1264, 2
      %v1266 = vadd.f32 %v1264, %v1265
      %v1267 = vrot.slane %v1266, 1
      %v1268 = vadd.f32 %v1266, %v1267
      %v1271 = vrot.slane %v1268, 7
      %v1272 = vsel %vm1185, %v1247, %v1271
      %v1274 = vadd.f32 %v1194, %v1272
      %1275 = vst.msk [vmem:[#allocation4] sm:$0x3] %vm1192, %v1274
      %v1277 = vperm.slane %v1188, 0
      %v1278 = vperm.slane %v1188, 1
      %v1281 = vsel %vm1185, %v1277, -inf
      %v1282 = vsel %vm1185, %v1278, -inf
      %v1283 = vmax.f32 %v1281, %v1282
      %1284 = vmax.xlane.f32.xlu0 %v1283
      %v1285 = vpop.xlane.xlu0 %1284
      %v1286 = vrot.slane %v1285, 4
      %v1287 = vmax.f32 %v1285, %v1286
      %v1288 = vrot.slane %v1287, 2
      %v1289 = vmax.f32 %v1287, %v1288
      %v1290 = vrot.slane %v1289, 1
      %v1291 = vmax.f32 %v1289, %v1290
      %s1292 = vtos %v1291
      %s1293 = scalar_lea.smem [#allocation5], 0
      %1294 = sst [smem:[%s1293]] %s1292
    $region25: #{tpu_custom_call.1} parent=1 // pred_fallthru
      _
    // Predicated region
    $region26: #{tpu_custom_call.1} parent=1 // pred_check
      %p1295 = pneg %p18
    $region27: #{tpu_custom_call.1} parent=1 // pred_check_branch
      %1297 = sbr.rel (%p1295) target = $region29
    $region28: #{tpu_custom_call.1} parent=1 // pred_region
      %v1298 = vld [vmem:[#allocation4] sm:$0x3]
      %v1299 = vmul.f32 %v1298, 1.442695
      %v1300 = vpow.pop %v1299
      %v1301 = vld [vmem:[%s3] sm:$0xff]
      %v1302 = vld [vmem:[%s3 + $0x8] sm:$0xff]
      %v1303 = vld [vmem:[#allocation2] sm:$0xff]
      %v1304 = vld [vmem:[#allocation2 + $0x8] sm:$0xff]
      %v1305 = vld [vmem:[#allocation2 + $0x10] sm:$0xff]
      %v1306 = vld [vmem:[#allocation2 + $0x18] sm:$0xff]
      %1308 = vset.pattern.permute.xlu0 0
      %1309 = vperm.xlu0 %1308, %v1301
      %v1310 = vpop.permute.xlu0 %1309
      %1313 = vset.pattern.permute.xlu0 0
      %1314 = vperm.xlu0 %1313, %v1302
      %v1315 = vpop.permute.xlu0 %1314
      %v1318 = vperm.slane %v1300, 0
      %v1319 = vperm.slane %v1300, 1
      %v1322 = vmul.f32 %v1310, %v1318
      %v1323 = vmul.f32 %v1310, %v1319
      %v1324 = vmul.f32 %v1315, %v1318
      %v1325 = vmul.f32 %v1315, %v1319
      %v1326 = vadd.f32 %v1303, %v1322
      %v1327 = vadd.f32 %v1304, %v1323
      %v1328 = vadd.f32 %v1305, %v1324
      %v1329 = vadd.f32 %v1306, %v1325
      %1330 = vset.pattern.permute.xlu0 1
      %1331 = vperm.xlu0 %1330, %v1301
      %v1332 = vpop.permute.xlu0 %1331
      %1334 = vset.pattern.permute.xlu0 1
      %1335 = vperm.xlu0 %1334, %v1302
      %v1336 = vpop.permute.xlu0 %1335
      %v1338 = vadd.f32 %v1326, %v1332
      %v1339 = vadd.f32 %v1327, %v1332
      %v1340 = vadd.f32 %v1328, %v1336
      %v1341 = vadd.f32 %v1329, %v1336
      %1342 = vst [vmem:[#allocation6] sm:$0xff] %v1338
      %1343 = vst [vmem:[#allocation6 + $0x8] sm:$0xff] %v1339
      %1344 = vst [vmem:[#allocation6 + $0x10] sm:$0xff] %v1340
      %1345 = vst [vmem:[#allocation6 + $0x18] sm:$0xff] %v1341
    $region29: #{tpu_custom_call.1} parent=1 // pred_fallthru
      _
    // Predicated region
    $region30: #{tpu_custom_call.1} parent=1 // pred_check
      _
    $region31: #{tpu_custom_call.1} parent=1 // pred_check_branch
      %1347 = sbr.rel (0) target = $region33
    $region32: #{tpu_custom_call.1} parent=1 // pred_region
      %1349 = vsyncadd [#allocation7], 0
      %s1350 = sshll.u32 [#allocation6], 4
      %s1351 = int_to_ptr.vmem [resolvable:$true] %s1350
      %s1352 = sshll.u32 %s4, 4
      %s1353 = int_to_ptr.hbm [resolvable:$true] %s1352
      %1358 = dma.vmem_to_hbm [thread:$0]  %s1351, 512, %s1353, [#allocation7], 256, 256, 16
    $region33: #{tpu_custom_call.1} parent=1 // pred_fallthru
      _
    // Predicated region
    $region34: #{tpu_custom_call.1} parent=1 // pred_check
      _
    $region35: #{tpu_custom_call.1} parent=1 // pred_check_branch
      %1360 = sbr.rel (0) target = $region37
    $region36: #{tpu_custom_call.1} parent=1 // pred_region
      %1362 = dma.done [#allocation7], 512
    $region37: #{tpu_custom_call.1} parent=1 // pred_fallthru
      _
    %1363 = vsyncpa [#allocation7], 1

</llo_original>
